<compile_context>
chip_gen: v5e
topology: v5e:2x2
jax: 0.10.0
libtpu: 0.0.40
codegen_flags: <defaults>
</compile_context>

<pallas_src>
import math
import numpy as np
import jax
import jax.numpy as jnp
from jax.experimental import pallas as pl
from jax.experimental.pallas import tpu as pltpu

# ---- small synthetic config (consistent with the module's constructor) ----
INPUT_DIM = 4
D_MODEL = 32
NUM_HEADS = 4
NUM_LAYERS = 2
D_FF = 64
BATCH = 2
SEQ = 8
EPS = 1e-5                       # PyTorch nn.LayerNorm default
D_K = D_MODEL // NUM_HEADS
N_TOK = BATCH * SEQ
LANES = 128
NEG = -1e30                      # finite additive mask bias (no -inf hazard)

# ---- packed parameter-slab layout (all row offsets are multiples of 8) ----
ROW_W_EMB = 0        # (INPUT_DIM, D_MODEL)
ROW_PE    = 8        # (N_TOK, D_MODEL)  batch-tiled PE + embedding bias
ROW_MASK  = 24       # (N_TOK, N_TOK)    additive mask bias (0 / -1e30)
ROW_WOUT  = 40       # (D_MODEL, 128)    output weight replicated across lanes
ROW_BOUT  = 72       # (1, 1)
HDR_ROWS  = 80

OFF_WQKV = 0         # (3H*dk, D)        head-major fused QKV weight (Q scaled)
OFF_BQKV = 96        # (3H*N_TOK, dk)    pre-broadcast head-major QKV bias
OFF_WO   = 288       # (H*dk, D)
OFF_BO   = 320       # (1, D)
OFF_G1   = 328       # (1, D)
OFF_BE1  = 336       # (1, D)
OFF_G2   = 344       # (1, D)
OFF_BE2  = 352       # (1, D)
OFF_W1   = 360       # (D, D_FF)
OFF_B1   = 392       # (1, D_FF)
OFF_W2   = 400       # (D_FF, D)
OFF_B2   = 464       # (1, D)
LAYER_ROWS = 472

TOTAL_ROWS = HDR_ROWS + NUM_LAYERS * LAYER_ROWS      # = 1024


def moirai_kernel(x_ref, p_ref, o_ref):
    N, D, H, dk, F = N_TOK, D_MODEL, NUM_HEADS, D_K, D_FF

    def layer_norm(y, gamma, beta):
        # one-pass variance: the two cross-lane reduces are independent
        mu = jnp.mean(y, axis=-1, keepdims=True)
        ms = jnp.mean(y * y, axis=-1, keepdims=True)
        var = ms - mu * mu
        return (y - mu) * jax.lax.rsqrt(var + EPS) * gamma + beta

    # ---- input embedding: one small MXU matmul, then (PE + emb-bias) add ----
    x = x_ref[...]                                            # (N, INPUT_DIM)
    w_emb = p_ref[ROW_W_EMB:ROW_W_EMB + INPUT_DIM, :D]        # (4, D)
    pe_b = p_ref[ROW_PE:ROW_PE + N, :D]                       # (N, D)
    h = jnp.dot(x, w_emb, preferred_element_type=jnp.float32) + pe_b

    # precomputed additive causal + same-batch mask bias over flattened rows
    mask_bias = p_ref[ROW_MASK:ROW_MASK + N, :N]              # (N, N)

    for l in range(NUM_LAYERS):
        base = HDR_ROWS + l * LAYER_ROWS
        wqkv = p_ref[base + OFF_WQKV:base + OFF_WQKV + 3 * H * dk, :D]
        wqkv = wqkv.reshape(3 * H, dk, D)                     # tile-aligned split
        bqkv = p_ref[base + OFF_BQKV:base + OFF_BQKV + 3 * H * N, :dk]
        bqkv = bqkv.reshape(3 * H, N, dk)
        wo_h = p_ref[base + OFF_WO:base + OFF_WO + H * dk, :D].reshape(H, dk, D)
        bo   = p_ref[base + OFF_BO:base + OFF_BO + 1, :D]
        g1   = p_ref[base + OFF_G1:base + OFF_G1 + 1, :D]
        be1  = p_ref[base + OFF_BE1:base + OFF_BE1 + 1, :D]
        g2   = p_ref[base + OFF_G2:base + OFF_G2 + 1, :D]
        be2  = p_ref[base + OFF_BE2:base + OFF_BE2 + 1, :D]
        w1   = p_ref[base + OFF_W1:base + OFF_W1 + D, :F]
        b1   = p_ref[base + OFF_B1:base + OFF_B1 + 1, :F]
        w2   = p_ref[base + OFF_W2:base + OFF_W2 + F, :D]
        b2   = p_ref[base + OFF_B2:base + OFF_B2 + 1, :D]

        # ---- attention: heads on the leading batch dim, no lane relayout ----
        hb = jnp.broadcast_to(h[None, :, :], (3 * H, N, D))
        qkv = jnp.einsum('hnd,hkd->hnk', hb, wqkv,
                         preferred_element_type=jnp.float32) + bqkv   # (3H,N,dk)
        q_h, k_h, v_h = qkv[:H], qkv[H:2 * H], qkv[2 * H:]            # free slices

        sc = jnp.einsum('hnd,hmd->hnm', q_h, k_h,
                        preferred_element_type=jnp.float32)           # (H,N,N)
        sc = sc + mask_bias                                           # additive mask
        mx = jnp.max(sc, axis=-1, keepdims=True)
        e = jnp.exp(sc - mx)
        p = e / jnp.sum(e, axis=-1, keepdims=True)                    # exact softmax
        ctx = jnp.einsum('hnm,hmd->hnd', p, v_h,
                         preferred_element_type=jnp.float32)          # (H,N,dk)

        # output projection per head block, summed over heads == concat @ w_o
        # (kept as 2 steps: multi-contracting-dim dot_general is not reliably
        #  lowered by Mosaic; the sum is 3 VPU adds of (16,32) tiles)
        out_h = jnp.einsum('hnk,hkd->hnd', ctx, wo_h,
                           preferred_element_type=jnp.float32)        # (H,N,D)
        attn = jnp.sum(out_h, axis=0) + bo

        # add & norm 1
        h = layer_norm(h + attn, g1, be1)

        # feed-forward: Linear -> ReLU -> (Dropout=id) -> Linear
        ff = jnp.dot(h, w1, preferred_element_type=jnp.float32) + b1
        ff = jnp.maximum(ff, 0.0)
        ff = jnp.dot(ff, w2, preferred_element_type=jnp.float32) + b2

        # add & norm 2
        h = layer_norm(h + ff, g2, be2)

    # ---- output head: matmul against lane-replicated w_out -> lane-dense store
    wout = p_ref[ROW_WOUT:ROW_WOUT + D, :]                    # (D, 128)
    bout = p_ref[ROW_BOUT:ROW_BOUT + 1, :1]                   # (1, 1)
    out = jnp.dot(h, wout, preferred_element_type=jnp.float32) + bout
    o_ref[...] = out.astype(o_ref.dtype)                      # (N, 128), col0 = result


def make_positional_encoding(seq, d):
    pe = np.zeros((seq, d), dtype=np.float32)
    pos = np.arange(seq, dtype=np.float32)[:, None]
    div = np.exp(np.arange(0, d, 2, dtype=np.float32) * (-np.log(10000.0) / d))
    pe[:, 0::2] = np.sin(pos * div)
    pe[:, 1::2] = np.cos(pos * div)
    return pe


def init_params(key):
    keys = iter(jax.random.split(key, 64))

    def rn(shape, scale=0.05):
        return jax.random.normal(next(keys), shape, jnp.float32) * scale

    L, D, F = NUM_LAYERS, D_MODEL, D_FF
    # "math layout": y = x @ w + b
    return dict(
        w_emb=rn((INPUT_DIM, D)), b_emb=rn((1, D)),
        wq=rn((L, D, D)), bq=rn((L, 1, D)),
        wk=rn((L, D, D)), bk=rn((L, 1, D)),
        wv=rn((L, D, D)), bv=rn((L, 1, D)),
        wo=rn((L, D, D)), bo=rn((L, 1, D)),
        g1=jnp.ones((L, 1, D), jnp.float32), be1=jnp.zeros((L, 1, D), jnp.float32),
        g2=jnp.ones((L, 1, D), jnp.float32), be2=jnp.zeros((L, 1, D), jnp.float32),
        w1=rn((L, D, F)), b1=rn((L, 1, F)),
        w2=rn((L, F, D)), b2=rn((L, 1, D)),
        wout=rn((D, 1)), bout=rn((1, 1)),
    )


def pack_params(raw):
    """Host-side one-time prep: fold the 1/sqrt(dk) scale, reorder QKV / w_o
    weights head-major, pre-broadcast the QKV bias, fold the embedding bias
    into a batch-tiled PE buffer, precompute the additive mask bias, replicate
    w_out across lanes, and pack everything into ONE (TOTAL_ROWS, 128) f32
    slab -> a single parameter DMA."""
    r = {k: np.asarray(v, np.float32) for k, v in raw.items()}
    slab = np.zeros((TOTAL_ROWS, LANES), np.float32)

    def put(row, a):
        a = np.asarray(a, np.float32)
        slab[row:row + a.shape[0], :a.shape[1]] = a

    put(ROW_W_EMB, r['w_emb'])
    pe = make_positional_encoding(SEQ, D_MODEL)
    put(ROW_PE, np.tile(pe, (BATCH, 1)) + r['b_emb'])          # PE + emb bias

    n_i = np.arange(N_TOK)[:, None]
    m_i = np.arange(N_TOK)[None, :]
    keep = ((n_i // SEQ) == (m_i // SEQ)) & ((m_i % SEQ) <= (n_i % SEQ))
    put(ROW_MASK, np.where(keep, 0.0, NEG).astype(np.float32))

    put(ROW_WOUT, np.tile(r['wout'], (1, LANES)))              # (D,1) -> (D,128)
    put(ROW_BOUT, r['bout'])

    scale = 1.0 / math.sqrt(D_K)
    for l in range(NUM_LAYERS):
        base = HDR_ROWS + l * LAYER_ROWS
        # head-major QKV weight w[h,k,d]; heads 0..H-1 = Q (scale folded),
        # H..2H-1 = K, 2H..3H-1 = V.
        wq_h = (r['wq'][l] * scale).T.reshape(NUM_HEADS, D_K, D_MODEL)
        wk_h = r['wk'][l].T.reshape(NUM_HEADS, D_K, D_MODEL)
        wv_h = r['wv'][l].T.reshape(NUM_HEADS, D_K, D_MODEL)
        wqkv = np.concatenate([wq_h, wk_h, wv_h], axis=0)       # (3H, dk, D)
        put(base + OFF_WQKV, wqkv.reshape(3 * NUM_HEADS * D_K, D_MODEL))

        bqkv = np.concatenate([r['bq'][l] * scale, r['bk'][l], r['bv'][l]],
                              axis=-1).reshape(3 * NUM_HEADS, 1, D_K)
        bqkv = np.tile(bqkv, (1, N_TOK, 1))                     # pre-broadcast
        put(base + OFF_BQKV, bqkv.reshape(3 * NUM_HEADS * N_TOK, D_K))

        put(base + OFF_WO, r['wo'][l])                          # (H*dk, D) row-major
        put(base + OFF_BO, r['bo'][l])
        put(base + OFF_G1, r['g1'][l]);  put(base + OFF_BE1, r['be1'][l])
        put(base + OFF_G2, r['g2'][l]);  put(base + OFF_BE2, r['be2'][l])
        put(base + OFF_W1, r['w1'][l]);  put(base + OFF_B1, r['b1'][l])
        put(base + OFF_W2, r['w2'][l]);  put(base + OFF_B2, r['b2'][l])

    return jnp.asarray(slab)


def moirai_forward(x, slab):
    B, S, _ = x.shape
    x2 = x.reshape(B * S, INPUT_DIM)                    # flatten (B, S) -> rows
    vm = pl.BlockSpec(memory_space=pltpu.MemorySpace.VMEM)
    out = pl.pallas_call(
        moirai_kernel,
        out_shape=jax.ShapeDtypeStruct((B * S, LANES), jnp.float32),
        in_specs=[vm, vm],                              # x + one packed param slab
        out_specs=vm,
    )(x2, slab)
    return out[:, :1].reshape(B, S, 1)


if __name__ == "__main__":
    key = jax.random.PRNGKey(0)
    k_params, k_x = jax.random.split(key)
    raw_params = init_params(k_params)
    slab = pack_params(raw_params)
    x = jax.random.normal(k_x, (BATCH, SEQ, INPUT_DIM), jnp.float32)

    out = jax.jit(moirai_forward)(x, slab)
    out = jax.block_until_ready(out)

    assert out.shape == (BATCH, SEQ, 1)
    assert bool(jnp.all(jnp.isfinite(out)))
    print("KERNEL_OK")
</pallas_src>

<mosaic_0001>
module attributes {stable_mosaic.version = 11 : i64} {
  func.func @moirai_kernel(%arg0: memref<16x4xf32, #tpu.memory_space<vmem>>, %arg1: memref<1024x128xf32, #tpu.memory_space<vmem>>, %arg2: memref<16x128xf32, #tpu.memory_space<vmem>>) attributes {dimension_semantics = [], scalar_prefetch = 0 : i64, scratch_operands = 0 : i64, tpu.core_type = #tpu.core_type<tc>} {
    %c0 = arith.constant 0 : index
    %c0_0 = arith.constant 0 : index
    %0 = vector.load %arg0[%c0, %c0_0] : memref<16x4xf32, #tpu.memory_space<vmem>>, vector<16x4xf32>
    %c0_1 = arith.constant 0 : index
    %c0_2 = arith.constant 0 : index
    %1 = vector.load %arg1[%c0_1, %c0_2] : memref<1024x128xf32, #tpu.memory_space<vmem>>, vector<4x32xf32>
    %c8 = arith.constant 8 : index
    %c0_3 = arith.constant 0 : index
    %2 = vector.load %arg1[%c8, %c0_3] : memref<1024x128xf32, #tpu.memory_space<vmem>>, vector<16x32xf32>
    %cst = arith.constant dense<0.000000e+00> : vector<16x32xf32>
    %3 = tpu.matmul %0, %1, %cst {dimension_numbers = #tpu.dot_dimension_numbers<[1], [0], [0], [1], [0, 0, 1, 1], [], []>} : vector<16x4xf32>, vector<4x32xf32>, vector<16x32xf32> -> vector<16x32xf32>
    %4 = arith.addf %3, %2 : vector<16x32xf32>
    %c24 = arith.constant 24 : index
    %c0_4 = arith.constant 0 : index
    %5 = vector.load %arg1[%c24, %c0_4] : memref<1024x128xf32, #tpu.memory_space<vmem>>, vector<16x16xf32>
    %c80 = arith.constant 80 : index
    %c0_5 = arith.constant 0 : index
    %6 = vector.load %arg1[%c80, %c0_5] : memref<1024x128xf32, #tpu.memory_space<vmem>>, vector<96x32xf32>
    %7 = vector.shape_cast %6 : vector<96x32xf32> to vector<12x8x32xf32>
    %c176 = arith.constant 176 : index
    %c0_6 = arith.constant 0 : index
    %8 = vector.load %arg1[%c176, %c0_6] : memref<1024x128xf32, #tpu.memory_space<vmem>>, vector<192x8xf32>
    %9 = vector.shape_cast %8 : vector<192x8xf32> to vector<12x16x8xf32>
    %c368 = arith.constant 368 : index
    %c0_7 = arith.constant 0 : index
    %10 = vector.load %arg1[%c368, %c0_7] : memref<1024x128xf32, #tpu.memory_space<vmem>>, vector<32x32xf32>
    %11 = vector.shape_cast %10 : vector<32x32xf32> to vector<4x8x32xf32>
    %c400 = arith.constant 400 : index
    %c0_8 = arith.constant 0 : index
    %12 = vector.load %arg1[%c400, %c0_8] : memref<1024x128xf32, #tpu.memory_space<vmem>>, vector<1x32xf32>
    %c408 = arith.constant 408 : index
    %c0_9 = arith.constant 0 : index
    %13 = vector.load %arg1[%c408, %c0_9] : memref<1024x128xf32, #tpu.memory_space<vmem>>, vector<1x32xf32>
    %c416 = arith.constant 416 : index
    %c0_10 = arith.constant 0 : index
    %14 = vector.load %arg1[%c416, %c0_10] : memref<1024x128xf32, #tpu.memory_space<vmem>>, vector<1x32xf32>
    %c424 = arith.constant 424 : index
    %c0_11 = arith.constant 0 : index
    %15 = vector.load %arg1[%c424, %c0_11] : memref<1024x128xf32, #tpu.memory_space<vmem>>, vector<1x32xf32>
    %c432 = arith.constant 432 : index
    %c0_12 = arith.constant 0 : index
    %16 = vector.load %arg1[%c432, %c0_12] : memref<1024x128xf32, #tpu.memory_space<vmem>>, vector<1x32xf32>
    %c440 = arith.constant 440 : index
    %c0_13 = arith.constant 0 : index
    %17 = vector.load %arg1[%c440, %c0_13] : memref<1024x128xf32, #tpu.memory_space<vmem>>, vector<32x64xf32>
    %c472 = arith.constant 472 : index
    %c0_14 = arith.constant 0 : index
    %18 = vector.load %arg1[%c472, %c0_14] : memref<1024x128xf32, #tpu.memory_space<vmem>>, vector<1x64xf32>
    %c480 = arith.constant 480 : index
    %c0_15 = arith.constant 0 : index
    %19 = vector.load %arg1[%c480, %c0_15] : memref<1024x128xf32, #tpu.memory_space<vmem>>, vector<64x32xf32>
    %c544 = arith.constant 544 : index
    %c0_16 = arith.constant 0 : index
    %20 = vector.load %arg1[%c544, %c0_16] : memref<1024x128xf32, #tpu.memory_space<vmem>>, vector<1x32xf32>
    %21 = vector.shape_cast %4 : vector<16x32xf32> to vector<1x16x32xf32>
    %22 = vector.shape_cast %21 : vector<1x16x32xf32> to vector<1x16x32xf32>
    %23 = vector.broadcast %22 : vector<1x16x32xf32> to vector<12x16x32xf32>
    "tpu.trace_start"() <{level = 10 : i32, message = "hnd,hkd->hnk"}> : () -> ()
    %cst_17 = arith.constant dense<0.000000e+00> : vector<12x16x8xf32>
    %24 = tpu.matmul %23, %7, %cst_17 {dimension_numbers = #tpu.dot_dimension_numbers<[2], [2], [1], [1], [0, 0, 0, 1, 1, 1], [0], [0]>} : vector<12x16x32xf32>, vector<12x8x32xf32>, vector<12x16x8xf32> -> vector<12x16x8xf32>
    "tpu.trace_stop"() : () -> ()
    %25 = arith.addf %24, %9 : vector<12x16x8xf32>
    %26 = vector.extract_strided_slice %25 {offsets = [0, 0, 0], sizes = [4, 16, 8], strides = [1, 1, 1]} : vector<12x16x8xf32> to vector<4x16x8xf32>
    %27 = vector.extract_strided_slice %25 {offsets = [4, 0, 0], sizes = [4, 16, 8], strides = [1, 1, 1]} : vector<12x16x8xf32> to vector<4x16x8xf32>
    %28 = vector.extract_strided_slice %25 {offsets = [8, 0, 0], sizes = [4, 16, 8], strides = [1, 1, 1]} : vector<12x16x8xf32> to vector<4x16x8xf32>
    "tpu.trace_start"() <{level = 10 : i32, message = "hnd,hmd->hnm"}> : () -> ()
    %cst_18 = arith.constant dense<0.000000e+00> : vector<4x16x16xf32>
    %29 = tpu.matmul %26, %27, %cst_18 {dimension_numbers = #tpu.dot_dimension_numbers<[2], [2], [1], [1], [0, 0, 0, 1, 1, 1], [0], [0]>} : vector<4x16x8xf32>, vector<4x16x8xf32>, vector<4x16x16xf32> -> vector<4x16x16xf32>
    "tpu.trace_stop"() : () -> ()
    %30 = vector.shape_cast %5 : vector<16x16xf32> to vector<1x16x16xf32>
    %31 = vector.broadcast %30 : vector<1x16x16xf32> to vector<4x16x16xf32>
    %32 = arith.addf %29, %31 : vector<4x16x16xf32>
    %cst_19 = arith.constant dense<0xFF800000> : vector<4x16xf32>
    %33 = vector.multi_reduction <maximumf>, %32, %cst_19 [2] : vector<4x16x16xf32> to vector<4x16xf32>
    %34 = vector.shape_cast %33 : vector<4x16xf32> to vector<4x16x1xf32>
    %35 = vector.broadcast %34 : vector<4x16x1xf32> to vector<4x16x16xf32>
    %36 = arith.subf %32, %35 : vector<4x16x16xf32>
    %37 = math.exp %36 : vector<4x16x16xf32>
    %cst_20 = arith.constant dense<0.000000e+00> : vector<4x16xf32>
    %38 = vector.multi_reduction <add>, %37, %cst_20 [2] : vector<4x16x16xf32> to vector<4x16xf32>
    %39 = vector.shape_cast %38 : vector<4x16xf32> to vector<4x16x1xf32>
    %40 = vector.broadcast %39 : vector<4x16x1xf32> to vector<4x16x16xf32>
    %41 = arith.divf %37, %40 : vector<4x16x16xf32>
    "tpu.trace_start"() <{level = 10 : i32, message = "hnm,hmd->hnd"}> : () -> ()
    %cst_21 = arith.constant dense<0.000000e+00> : vector<4x16x8xf32>
    %42 = tpu.matmul %41, %28, %cst_21 {dimension_numbers = #tpu.dot_dimension_numbers<[2], [1], [1], [2], [0, 0, 0, 1, 1, 2], [0], [0]>} : vector<4x16x16xf32>, vector<4x16x8xf32>, vector<4x16x8xf32> -> vector<4x16x8xf32>
    "tpu.trace_stop"() : () -> ()
    "tpu.trace_start"() <{level = 10 : i32, message = "hnk,hkd->hnd"}> : () -> ()
    %cst_22 = arith.constant dense<0.000000e+00> : vector<4x16x32xf32>
    %43 = tpu.matmul %42, %11, %cst_22 {dimension_numbers = #tpu.dot_dimension_numbers<[2], [1], [1], [2], [0, 0, 0, 1, 1, 2], [0], [0]>} : vector<4x16x8xf32>, vector<4x8x32xf32>, vector<4x16x32xf32> -> vector<4x16x32xf32>
    "tpu.trace_stop"() : () -> ()
    %cst_23 = arith.constant dense<0.000000e+00> : vector<16x32xf32>
    %44 = vector.multi_reduction <add>, %43, %cst_23 [0] : vector<4x16x32xf32> to vector<16x32xf32>
    %45 = vector.broadcast %12 : vector<1x32xf32> to vector<16x32xf32>
    %46 = arith.addf %44, %45 : vector<16x32xf32>
    %47 = arith.addf %4, %46 : vector<16x32xf32>
    %cst_24 = arith.constant dense<0.000000e+00> : vector<16xf32>
    %48 = vector.multi_reduction <add>, %47, %cst_24 [1] : vector<16x32xf32> to vector<16xf32>
    %49 = vector.shape_cast %48 : vector<16xf32> to vector<16x1xf32>
    %cst_25 = arith.constant 3.200000e+01 : f32
    %50 = vector.broadcast %cst_25 : f32 to vector<16x1xf32>
    %51 = arith.divf %49, %50 : vector<16x1xf32>
    %52 = arith.mulf %47, %47 : vector<16x32xf32>
    %cst_26 = arith.constant dense<0.000000e+00> : vector<16xf32>
    %53 = vector.multi_reduction <add>, %52, %cst_26 [1] : vector<16x32xf32> to vector<16xf32>
    %54 = vector.shape_cast %53 : vector<16xf32> to vector<16x1xf32>
    %cst_27 = arith.constant 3.200000e+01 : f32
    %55 = vector.broadcast %cst_27 : f32 to vector<16x1xf32>
    %56 = arith.divf %54, %55 : vector<16x1xf32>
    %57 = arith.mulf %51, %51 : vector<16x1xf32>
    %58 = arith.subf %56, %57 : vector<16x1xf32>
    %59 = vector.broadcast %51 : vector<16x1xf32> to vector<16x32xf32>
    %60 = arith.subf %47, %59 : vector<16x32xf32>
    %cst_28 = arith.constant 9.99999974E-6 : f32
    %61 = vector.broadcast %cst_28 : f32 to vector<16x1xf32>
    %62 = arith.addf %58, %61 : vector<16x1xf32>
    %63 = math.rsqrt %62 : vector<16x1xf32>
    %64 = vector.broadcast %63 : vector<16x1xf32> to vector<16x32xf32>
    %65 = arith.mulf %60, %64 : vector<16x32xf32>
    %66 = vector.broadcast %13 : vector<1x32xf32> to vector<16x32xf32>
    %67 = arith.mulf %65, %66 : vector<16x32xf32>
    %68 = vector.broadcast %14 : vector<1x32xf32> to vector<16x32xf32>
    %69 = arith.addf %67, %68 : vector<16x32xf32>
    %cst_29 = arith.constant dense<0.000000e+00> : vector<16x64xf32>
    %70 = tpu.matmul %69, %17, %cst_29 {dimension_numbers = #tpu.dot_dimension_numbers<[1], [0], [0], [1], [0, 0, 1, 1], [], []>} : vector<16x32xf32>, vector<32x64xf32>, vector<16x64xf32> -> vector<16x64xf32>
    %71 = vector.broadcast %18 : vector<1x64xf32> to vector<16x64xf32>
    %72 = arith.addf %70, %71 : vector<16x64xf32>
    %cst_30 = arith.constant 0.000000e+00 : f32
    %73 = vector.broadcast %cst_30 : f32 to vector<16x64xf32>
    %74 = arith.maximumf %72, %73 : vector<16x64xf32>
    %cst_31 = arith.constant dense<0.000000e+00> : vector<16x32xf32>
    %75 = tpu.matmul %74, %19, %cst_31 {dimension_numbers = #tpu.dot_dimension_numbers<[1], [0], [0], [1], [0, 0, 1, 1], [], []>} : vector<16x64xf32>, vector<64x32xf32>, vector<16x32xf32> -> vector<16x32xf32>
    %76 = vector.broadcast %20 : vector<1x32xf32> to vector<16x32xf32>
    %77 = arith.addf %75, %76 : vector<16x32xf32>
    %78 = arith.addf %69, %77 : vector<16x32xf32>
    %cst_32 = arith.constant dense<0.000000e+00> : vector<16xf32>
    %79 = vector.multi_reduction <add>, %78, %cst_32 [1] : vector<16x32xf32> to vector<16xf32>
    %80 = vector.shape_cast %79 : vector<16xf32> to vector<16x1xf32>
    %cst_33 = arith.constant 3.200000e+01 : f32
    %81 = vector.broadcast %cst_33 : f32 to vector<16x1xf32>
    %82 = arith.divf %80, %81 : vector<16x1xf32>
    %83 = arith.mulf %78, %78 : vector<16x32xf32>
    %cst_34 = arith.constant dense<0.000000e+00> : vector<16xf32>
    %84 = vector.multi_reduction <add>, %83, %cst_34 [1] : vector<16x32xf32> to vector<16xf32>
    %85 = vector.shape_cast %84 : vector<16xf32> to vector<16x1xf32>
    %cst_35 = arith.constant 3.200000e+01 : f32
    %86 = vector.broadcast %cst_35 : f32 to vector<16x1xf32>
    %87 = arith.divf %85, %86 : vector<16x1xf32>
    %88 = arith.mulf %82, %82 : vector<16x1xf32>
    %89 = arith.subf %87, %88 : vector<16x1xf32>
    %90 = vector.broadcast %82 : vector<16x1xf32> to vector<16x32xf32>
    %91 = arith.subf %78, %90 : vector<16x32xf32>
    %cst_36 = arith.constant 9.99999974E-6 : f32
    %92 = vector.broadcast %cst_36 : f32 to vector<16x1xf32>
    %93 = arith.addf %89, %92 : vector<16x1xf32>
    %94 = math.rsqrt %93 : vector<16x1xf32>
    %95 = vector.broadcast %94 : vector<16x1xf32> to vector<16x32xf32>
    %96 = arith.mulf %91, %95 : vector<16x32xf32>
    %97 = vector.broadcast %15 : vector<1x32xf32> to vector<16x32xf32>
    %98 = arith.mulf %96, %97 : vector<16x32xf32>
    %99 = vector.broadcast %16 : vector<1x32xf32> to vector<16x32xf32>
    %100 = arith.addf %98, %99 : vector<16x32xf32>
    %c552 = arith.constant 552 : index
    %c0_37 = arith.constant 0 : index
    %101 = vector.load %arg1[%c552, %c0_37] : memref<1024x128xf32, #tpu.memory_space<vmem>>, vector<96x32xf32>
    %102 = vector.shape_cast %101 : vector<96x32xf32> to vector<12x8x32xf32>
    %c648 = arith.constant 648 : index
    %c0_38 = arith.constant 0 : index
    %103 = vector.load %arg1[%c648, %c0_38] : memref<1024x128xf32, #tpu.memory_space<vmem>>, vector<192x8xf32>
    %104 = vector.shape_cast %103 : vector<192x8xf32> to vector<12x16x8xf32>
    %c840 = arith.constant 840 : index
    %c0_39 = arith.constant 0 : index
    %105 = vector.load %arg1[%c840, %c0_39] : memref<1024x128xf32, #tpu.memory_space<vmem>>, vector<32x32xf32>
    %106 = vector.shape_cast %105 : vector<32x32xf32> to vector<4x8x32xf32>
    %c872 = arith.constant 872 : index
    %c0_40 = arith.constant 0 : index
    %107 = vector.load %arg1[%c872, %c0_40] : memref<1024x128xf32, #tpu.memory_space<vmem>>, vector<1x32xf32>
    %c880 = arith.constant 880 : index
    %c0_41 = arith.constant 0 : index
    %108 = vector.load %arg1[%c880, %c0_41] : memref<1024x128xf32, #tpu.memory_space<vmem>>, vector<1x32xf32>
    %c888 = arith.constant 888 : index
    %c0_42 = arith.constant 0 : index
    %109 = vector.load %arg1[%c888, %c0_42] : memref<1024x128xf32, #tpu.memory_space<vmem>>, vector<1x32xf32>
    %c896 = arith.constant 896 : index
    %c0_43 = arith.constant 0 : index
    %110 = vector.load %arg1[%c896, %c0_43] : memref<1024x128xf32, #tpu.memory_space<vmem>>, vector<1x32xf32>
    %c904 = arith.constant 904 : index
    %c0_44 = arith.constant 0 : index
    %111 = vector.load %arg1[%c904, %c0_44] : memref<1024x128xf32, #tpu.memory_space<vmem>>, vector<1x32xf32>
    %c912 = arith.constant 912 : index
    %c0_45 = arith.constant 0 : index
    %112 = vector.load %arg1[%c912, %c0_45] : memref<1024x128xf32, #tpu.memory_space<vmem>>, vector<32x64xf32>
    %c944 = arith.constant 944 : index
    %c0_46 = arith.constant 0 : index
    %113 = vector.load %arg1[%c944, %c0_46] : memref<1024x128xf32, #tpu.memory_space<vmem>>, vector<1x64xf32>
    %c952 = arith.constant 952 : index
    %c0_47 = arith.constant 0 : index
    %114 = vector.load %arg1[%c952, %c0_47] : memref<1024x128xf32, #tpu.memory_space<vmem>>, vector<64x32xf32>
    %c1016 = arith.constant 1016 : index
    %c0_48 = arith.constant 0 : index
    %115 = vector.load %arg1[%c1016, %c0_48] : memref<1024x128xf32, #tpu.memory_space<vmem>>, vector<1x32xf32>
    %116 = vector.shape_cast %100 : vector<16x32xf32> to vector<1x16x32xf32>
    %117 = vector.shape_cast %116 : vector<1x16x32xf32> to vector<1x16x32xf32>
    %118 = vector.broadcast %117 : vector<1x16x32xf32> to vector<12x16x32xf32>
    "tpu.trace_start"() <{level = 10 : i32, message = "hnd,hkd->hnk"}> : () -> ()
    %cst_49 = arith.constant dense<0.000000e+00> : vector<12x16x8xf32>
    %119 = tpu.matmul %118, %102, %cst_49 {dimension_numbers = #tpu.dot_dimension_numbers<[2], [2], [1], [1], [0, 0, 0, 1, 1, 1], [0], [0]>} : vector<12x16x32xf32>, vector<12x8x32xf32>, vector<12x16x8xf32> -> vector<12x16x8xf32>
    "tpu.trace_stop"() : () -> ()
    %120 = arith.addf %119, %104 : vector<12x16x8xf32>
    %121 = vector.extract_strided_slice %120 {offsets = [0, 0, 0], sizes = [4, 16, 8], strides = [1, 1, 1]} : vector<12x16x8xf32> to vector<4x16x8xf32>
    %122 = vector.extract_strided_slice %120 {offsets = [4, 0, 0], sizes = [4, 16, 8], strides = [1, 1, 1]} : vector<12x16x8xf32> to vector<4x16x8xf32>
    %123 = vector.extract_strided_slice %120 {offsets = [8, 0, 0], sizes = [4, 16, 8], strides = [1, 1, 1]} : vector<12x16x8xf32> to vector<4x16x8xf32>
    "tpu.trace_start"() <{level = 10 : i32, message = "hnd,hmd->hnm"}> : () -> ()
    %cst_50 = arith.constant dense<0.000000e+00> : vector<4x16x16xf32>
    %124 = tpu.matmul %121, %122, %cst_50 {dimension_numbers = #tpu.dot_dimension_numbers<[2], [2], [1], [1], [0, 0, 0, 1, 1, 1], [0], [0]>} : vector<4x16x8xf32>, vector<4x16x8xf32>, vector<4x16x16xf32> -> vector<4x16x16xf32>
    "tpu.trace_stop"() : () -> ()
    %125 = vector.shape_cast %5 : vector<16x16xf32> to vector<1x16x16xf32>
    %126 = vector.broadcast %125 : vector<1x16x16xf32> to vector<4x16x16xf32>
    %127 = arith.addf %124, %126 : vector<4x16x16xf32>
    %cst_51 = arith.constant dense<0xFF800000> : vector<4x16xf32>
    %128 = vector.multi_reduction <maximumf>, %127, %cst_51 [2] : vector<4x16x16xf32> to vector<4x16xf32>
    %129 = vector.shape_cast %128 : vector<4x16xf32> to vector<4x16x1xf32>
    %130 = vector.broadcast %129 : vector<4x16x1xf32> to vector<4x16x16xf32>
    %131 = arith.subf %127, %130 : vector<4x16x16xf32>
    %132 = math.exp %131 : vector<4x16x16xf32>
    %cst_52 = arith.constant dense<0.000000e+00> : vector<4x16xf32>
    %133 = vector.multi_reduction <add>, %132, %cst_52 [2] : vector<4x16x16xf32> to vector<4x16xf32>
    %134 = vector.shape_cast %133 : vector<4x16xf32> to vector<4x16x1xf32>
    %135 = vector.broadcast %134 : vector<4x16x1xf32> to vector<4x16x16xf32>
    %136 = arith.divf %132, %135 : vector<4x16x16xf32>
    "tpu.trace_start"() <{level = 10 : i32, message = "hnm,hmd->hnd"}> : () -> ()
    %cst_53 = arith.constant dense<0.000000e+00> : vector<4x16x8xf32>
    %137 = tpu.matmul %136, %123, %cst_53 {dimension_numbers = #tpu.dot_dimension_numbers<[2], [1], [1], [2], [0, 0, 0, 1, 1, 2], [0], [0]>} : vector<4x16x16xf32>, vector<4x16x8xf32>, vector<4x16x8xf32> -> vector<4x16x8xf32>
    "tpu.trace_stop"() : () -> ()
    "tpu.trace_start"() <{level = 10 : i32, message = "hnk,hkd->hnd"}> : () -> ()
    %cst_54 = arith.constant dense<0.000000e+00> : vector<4x16x32xf32>
    %138 = tpu.matmul %137, %106, %cst_54 {dimension_numbers = #tpu.dot_dimension_numbers<[2], [1], [1], [2], [0, 0, 0, 1, 1, 2], [0], [0]>} : vector<4x16x8xf32>, vector<4x8x32xf32>, vector<4x16x32xf32> -> vector<4x16x32xf32>
    "tpu.trace_stop"() : () -> ()
    %cst_55 = arith.constant dense<0.000000e+00> : vector<16x32xf32>
    %139 = vector.multi_reduction <add>, %138, %cst_55 [0] : vector<4x16x32xf32> to vector<16x32xf32>
    %140 = vector.broadcast %107 : vector<1x32xf32> to vector<16x32xf32>
    %141 = arith.addf %139, %140 : vector<16x32xf32>
    %142 = arith.addf %100, %141 : vector<16x32xf32>
    %cst_56 = arith.constant dense<0.000000e+00> : vector<16xf32>
    %143 = vector.multi_reduction <add>, %142, %cst_56 [1] : vector<16x32xf32> to vector<16xf32>
    %144 = vector.shape_cast %143 : vector<16xf32> to vector<16x1xf32>
    %cst_57 = arith.constant 3.200000e+01 : f32
    %145 = vector.broadcast %cst_57 : f32 to vector<16x1xf32>
    %146 = arith.divf %144, %145 : vector<16x1xf32>
    %147 = arith.mulf %142, %142 : vector<16x32xf32>
    %cst_58 = arith.constant dense<0.000000e+00> : vector<16xf32>
    %148 = vector.multi_reduction <add>, %147, %cst_58 [1] : vector<16x32xf32> to vector<16xf32>
    %149 = vector.shape_cast %148 : vector<16xf32> to vector<16x1xf32>
    %cst_59 = arith.constant 3.200000e+01 : f32
    %150 = vector.broadcast %cst_59 : f32 to vector<16x1xf32>
    %151 = arith.divf %149, %150 : vector<16x1xf32>
    %152 = arith.mulf %146, %146 : vector<16x1xf32>
    %153 = arith.subf %151, %152 : vector<16x1xf32>
    %154 = vector.broadcast %146 : vector<16x1xf32> to vector<16x32xf32>
    %155 = arith.subf %142, %154 : vector<16x32xf32>
    %cst_60 = arith.constant 9.99999974E-6 : f32
    %156 = vector.broadcast %cst_60 : f32 to vector<16x1xf32>
    %157 = arith.addf %153, %156 : vector<16x1xf32>
    %158 = math.rsqrt %157 : vector<16x1xf32>
    %159 = vector.broadcast %158 : vector<16x1xf32> to vector<16x32xf32>
    %160 = arith.mulf %155, %159 : vector<16x32xf32>
    %161 = vector.broadcast %108 : vector<1x32xf32> to vector<16x32xf32>
    %162 = arith.mulf %160, %161 : vector<16x32xf32>
    %163 = vector.broadcast %109 : vector<1x32xf32> to vector<16x32xf32>
    %164 = arith.addf %162, %163 : vector<16x32xf32>
    %cst_61 = arith.constant dense<0.000000e+00> : vector<16x64xf32>
    %165 = tpu.matmul %164, %112, %cst_61 {dimension_numbers = #tpu.dot_dimension_numbers<[1], [0], [0], [1], [0, 0, 1, 1], [], []>} : vector<16x32xf32>, vector<32x64xf32>, vector<16x64xf32> -> vector<16x64xf32>
    %166 = vector.broadcast %113 : vector<1x64xf32> to vector<16x64xf32>
    %167 = arith.addf %165, %166 : vector<16x64xf32>
    %cst_62 = arith.constant 0.000000e+00 : f32
    %168 = vector.broadcast %cst_62 : f32 to vector<16x64xf32>
    %169 = arith.maximumf %167, %168 : vector<16x64xf32>
    %cst_63 = arith.constant dense<0.000000e+00> : vector<16x32xf32>
    %170 = tpu.matmul %169, %114, %cst_63 {dimension_numbers = #tpu.dot_dimension_numbers<[1], [0], [0], [1], [0, 0, 1, 1], [], []>} : vector<16x64xf32>, vector<64x32xf32>, vector<16x32xf32> -> vector<16x32xf32>
    %171 = vector.broadcast %115 : vector<1x32xf32> to vector<16x32xf32>
    %172 = arith.addf %170, %171 : vector<16x32xf32>
    %173 = arith.addf %164, %172 : vector<16x32xf32>
    %cst_64 = arith.constant dense<0.000000e+00> : vector<16xf32>
    %174 = vector.multi_reduction <add>, %173, %cst_64 [1] : vector<16x32xf32> to vector<16xf32>
    %175 = vector.shape_cast %174 : vector<16xf32> to vector<16x1xf32>
    %cst_65 = arith.constant 3.200000e+01 : f32
    %176 = vector.broadcast %cst_65 : f32 to vector<16x1xf32>
    %177 = arith.divf %175, %176 : vector<16x1xf32>
    %178 = arith.mulf %173, %173 : vector<16x32xf32>
    %cst_66 = arith.constant dense<0.000000e+00> : vector<16xf32>
    %179 = vector.multi_reduction <add>, %178, %cst_66 [1] : vector<16x32xf32> to vector<16xf32>
    %180 = vector.shape_cast %179 : vector<16xf32> to vector<16x1xf32>
    %cst_67 = arith.constant 3.200000e+01 : f32
    %181 = vector.broadcast %cst_67 : f32 to vector<16x1xf32>
    %182 = arith.divf %180, %181 : vector<16x1xf32>
    %183 = arith.mulf %177, %177 : vector<16x1xf32>
    %184 = arith.subf %182, %183 : vector<16x1xf32>
    %185 = vector.broadcast %177 : vector<16x1xf32> to vector<16x32xf32>
    %186 = arith.subf %173, %185 : vector<16x32xf32>
    %cst_68 = arith.constant 9.99999974E-6 : f32
    %187 = vector.broadcast %cst_68 : f32 to vector<16x1xf32>
    %188 = arith.addf %184, %187 : vector<16x1xf32>
    %189 = math.rsqrt %188 : vector<16x1xf32>
    %190 = vector.broadcast %189 : vector<16x1xf32> to vector<16x32xf32>
    %191 = arith.mulf %186, %190 : vector<16x32xf32>
    %192 = vector.broadcast %110 : vector<1x32xf32> to vector<16x32xf32>
    %193 = arith.mulf %191, %192 : vector<16x32xf32>
    %194 = vector.broadcast %111 : vector<1x32xf32> to vector<16x32xf32>
    %195 = arith.addf %193, %194 : vector<16x32xf32>
    %c40 = arith.constant 40 : index
    %c0_69 = arith.constant 0 : index
    %196 = vector.load %arg1[%c40, %c0_69] : memref<1024x128xf32, #tpu.memory_space<vmem>>, vector<32x128xf32>
    %c72 = arith.constant 72 : index
    %c0_70 = arith.constant 0 : index
    %197 = vector.load %arg1[%c72, %c0_70] : memref<1024x128xf32, #tpu.memory_space<vmem>>, vector<1x1xf32>
    %cst_71 = arith.constant dense<0.000000e+00> : vector<16x128xf32>
    %198 = tpu.matmul %195, %196, %cst_71 {dimension_numbers = #tpu.dot_dimension_numbers<[1], [0], [0], [1], [0, 0, 1, 1], [], []>} : vector<16x32xf32>, vector<32x128xf32>, vector<16x128xf32> -> vector<16x128xf32>
    %199 = vector.broadcast %197 : vector<1x1xf32> to vector<16x128xf32>
    %200 = arith.addf %198, %199 : vector<16x128xf32>
    %c0_72 = arith.constant 0 : index
    %c0_73 = arith.constant 0 : index
    %201 = vector.load %arg2[%c0_72, %c0_73] : memref<16x128xf32, #tpu.memory_space<vmem>>, vector<16x128xf32>
    tpu.vector_store %arg2[%c0_72, %c0_73], %200 {strides = array<i32>} : memref<16x128xf32, #tpu.memory_space<vmem>>, vector<16x128xf32>,
    return
  }
}

</mosaic_0001>

<llo_original>
// kernel: moirai_forward.1
$region0: #{moirai_forward.1}
  #allocation0 [shape = 'u32[]', space=smem, size = 0x4, offset = 0x4, fixed_abs, tag = 'smem constant byte address 0x4 - core index']
  #allocation1 [shape = 'u32[72,128]{1,0:T(1,128)}', space=vmem, size = 0x9000, scoped, tag = 'internal scratch']
  %s0 = inlined_call_operand.vmem [shape: f32[16,4], index: 0, kind: input, shape index: {}]
  %s1 = inlined_call_operand.hbm [shape: f32[1024,128], index: 1, kind: input, shape index: {}]
  %s2 = inlined_call_operand.vmem [shape: f32[16,128], index: 2, kind: output, shape index: {}]
  %s3 = sld [smem:[#allocation0]]
  $region22: #{moirai_forward.1} parent=0
    _
  %s5 = ssub.s32 1, %s3
  %s6 = scalar_select 0, %s5, %s3
  $region1: #{moirai_forward.1} parent=0
    #allocation2 [shape = 'u8[524288]{0}', space=vmem, size = 0x80000, scoped, tag = 'input window, operand 1, single buffered']
    #allocation3 [shape = 's32[1]{0}', space=sflag, size = 0x4, scoped, tag = 'scoped memory for moirai_forward.1']
    %7 = vsyncpa [#allocation3], 0
    // Predicated region
    $region2: #{moirai_forward.1} parent=1 // pred_check
      _
    $region3: #{moirai_forward.1} parent=1 // pred_check_branch
      %9 = sbr.rel (0) target = $region5
    $region4: #{moirai_forward.1} parent=1 // pred_region
      _
    $region5: #{moirai_forward.1} parent=1 // pred_fallthru
      _
    // Predicated region
    $region6: #{moirai_forward.1} parent=1 // pred_check
      _
    $region7: #{moirai_forward.1} parent=1 // pred_check_branch
      %11 = sbr.rel (0) target = $region9
    $region8: #{moirai_forward.1} parent=1 // pred_region
      %13 = vsyncadd [#allocation3], 0
      %s14 = sshll.u32 %s1, 4
      %s15 = int_to_ptr.hbm [resolvable:$true] %s14
      %s16 = sshll.u32 [#allocation2], 4
      %s17 = int_to_ptr.vmem [resolvable:$true] %s16
      %22 = dma.hbm_to_vmem [thread:$0]  %s15, 16384, %s17, [#allocation3], 128, 128, 8
    $region9: #{moirai_forward.1} parent=1 // pred_fallthru
      _
    // Predicated region
    $region10: #{moirai_forward.1} parent=1 // pred_check
      _
    $region11: #{moirai_forward.1} parent=1 // pred_check_branch
      %24 = sbr.rel (0) target = $region13
    $region12: #{moirai_forward.1} parent=1 // pred_region
      %26 = dma.done [#allocation3], 16384
    $region13: #{moirai_forward.1} parent=1 // pred_fallthru
      _
    %v27 = vld [vmem:[%s0] sm:$0xff]
    %v28 = vld [vmem:[%s0 + $0x8] sm:$0xff]
    %v29 = vld [vmem:[#allocation2] sm:$0xf]
    %v30 = vld [vmem:[#allocation2 + $0x8] sm:$0xff]
    %v31 = vld [vmem:[#allocation2 + $0x10] sm:$0xff]
    %vm32 = vcmask 31744
    %v34 = vsel %vm32, %v27, 0
    %v37 = vsel %vm32, %v28, 0
    %vm39 = vcmask 1043456
    %v41 = vsel %vm39, %v29, 0
    %43 = vmatpush.msra.mxu0 0.0
    %44 = vmatpush.msra.mxu0 0.0
    %45 = vmatpush.msra.mxu0 0.0
    %46 = vmatpush.msra.mxu0 0.0
    %47 = vmatpush.msra.mxu0 0.0
    %48 = vmatpush.msra.mxu0 0.0
    %49 = vmatpush.msra.mxu0 0.0
    %50 = vmatpush.msra.mxu0 0.0
    %51 = vmatpush.msra.mxu0 0.0
    %52 = vmatpush.msra.mxu0 0.0
    %53 = vmatpush.msra.mxu0 0.0
    %54 = vmatpush.msra.mxu0 0.0
    %55 = vmatpush.msra.mxu0 0.0
    %56 = vmatpush.msra.mxu0 0.0
    %57 = vmatpush.msra.mxu0 0.0
    %58 = vmatpush.msra.mxu0 %v41
    %59 = vmatmul.f32.gmra.mxu0 %v34
    %v60 = vpop.f32.mrf.mxu0
    %v61 = vadd.f32 %v30, %v60
    %62 = vmatmul.f32.gmra.mxu0 %v37
    %v63 = vpop.f32.mrf.mxu0
    %v64 = vadd.f32 %v31, %v63
    %65 = vdwg.mxu0
    %v66 = vld [vmem:[#allocation2 + $0x18] sm:$0xff]
    %v67 = vld [vmem:[#allocation2 + $0x20] sm:$0xff]
    %v68 = vld [vmem:[#allocation2 + $0x50] sm:$0xff]
    %v69 = vld [vmem:[#allocation2 + $0x58] sm:$0xff]
    %v70 = vld [vmem:[#allocation2 + $0x60] sm:$0xff]
    %v71 = vld [vmem:[#allocation2 + $0x68] sm:$0xff]
    %v72 = vld [vmem:[#allocation2 + $0x70] sm:$0xff]
    %v73 = vld [vmem:[#allocation2 + $0x78] sm:$0xff]
    %v74 = vld [vmem:[#allocation2 + $0x80] sm:$0xff]
    %v75 = vld [vmem:[#allocation2 + $0x88] sm:$0xff]
    %v76 = vld [vmem:[#allocation2 + $0x90] sm:$0xff]
    %v77 = vld [vmem:[#allocation2 + $0x98] sm:$0xff]
    %v78 = vld [vmem:[#allocation2 + $0xa0] sm:$0xff]
    %v79 = vld [vmem:[#allocation2 + $0xa8] sm:$0xff]
    %v80 = vld [vmem:[#allocation2 + $0xb0] sm:$0xff]
    %v81 = vld [vmem:[#allocation2 + $0xb8] sm:$0xff]
    %v82 = vld [vmem:[#allocation2 + $0xc0] sm:$0xff]
    %v83 = vld [vmem:[#allocation2 + $0xc8] sm:$0xff]
    %v84 = vld [vmem:[#allocation2 + $0xd0] sm:$0xff]
    %v85 = vld [vmem:[#allocation2 + $0xd8] sm:$0xff]
    %v86 = vld [vmem:[#allocation2 + $0xe0] sm:$0xff]
    %v87 = vld [vmem:[#allocation2 + $0xe8] sm:$0xff]
    %v88 = vld [vmem:[#allocation2 + $0xf0] sm:$0xff]
    %v89 = vld [vmem:[#allocation2 + $0xf8] sm:$0xff]
    %v90 = vld [vmem:[#allocation2 + $0x100] sm:$0xff]
    %v91 = vld [vmem:[#allocation2 + $0x108] sm:$0xff]
    %v92 = vld [vmem:[#allocation2 + $0x110] sm:$0xff]
    %v93 = vld [vmem:[#allocation2 + $0x118] sm:$0xff]
    %v94 = vld [vmem:[#allocation2 + $0x120] sm:$0xff]
    %v95 = vld [vmem:[#allocation2 + $0x128] sm:$0xff]
    %v96 = vld [vmem:[#allocation2 + $0x130] sm:$0xff]
    %v97 = vld [vmem:[#allocation2 + $0x138] sm:$0xff]
    %v98 = vld [vmem:[#allocation2 + $0x140] sm:$0xff]
    %v99 = vld [vmem:[#allocation2 + $0x148] sm:$0xff]
    %v100 = vld [vmem:[#allocation2 + $0x150] sm:$0xff]
    %v101 = vld [vmem:[#allocation2 + $0x158] sm:$0xff]
    %v102 = vld [vmem:[#allocation2 + $0x160] sm:$0xff]
    %v103 = vld [vmem:[#allocation2 + $0x168] sm:$0xff]
    %v104 = vld [vmem:[#allocation2 + $0x170] sm:$0xff]
    %v105 = vld [vmem:[#allocation2 + $0x178] sm:$0xff]
    %v106 = vld [vmem:[#allocation2 + $0x180] sm:$0xff]
    %v107 = vld [vmem:[#allocation2 + $0x188] sm:$0xff]
    %v108 = vld [vmem:[#allocation2 + $0x190] sm:$0x1]
    %v109 = vld [vmem:[#allocation2 + $0x198] sm:$0x1]
    %v110 = vld [vmem:[#allocation2 + $0x1a0] sm:$0x1]
    %v111 = vld [vmem:[#allocation2 + $0x1a8] sm:$0x1]
    %v112 = vld [vmem:[#allocation2 + $0x1b0] sm:$0x1]
    %v113 = vld [vmem:[#allocation2 + $0x1b8] sm:$0xff]
    %v114 = vld [vmem:[#allocation2 + $0x1c0] sm:$0xff]
    %v115 = vld [vmem:[#allocation2 + $0x1c8] sm:$0xff]
    %v116 = vld [vmem:[#allocation2 + $0x1d0] sm:$0xff]
    %v117 = vld [vmem:[#allocation2 + $0x1d8] sm:$0x1]
    %v118 = vld [vmem:[#allocation2 + $0x1e0] sm:$0xff]
    %v119 = vld [vmem:[#allocation2 + $0x1e8] sm:$0xff]
    %v120 = vld [vmem:[#allocation2 + $0x1f0] sm:$0xff]
    %v121 = vld [vmem:[#allocation2 + $0x1f8] sm:$0xff]
    %v122 = vld [vmem:[#allocation2 + $0x200] sm:$0xff]
    %v123 = vld [vmem:[#allocation2 + $0x208] sm:$0xff]
    %v124 = vld [vmem:[#allocation2 + $0x210] sm:$0xff]
    %v125 = vld [vmem:[#allocation2 + $0x218] sm:$0xff]
    %v126 = vld [vmem:[#allocation2 + $0x220] sm:$0x1]
    %vm127 = vcmask 261120
    %v129 = vsel %vm127, %v61, 0
    %v132 = vsel %vm127, %v64, 0
    %v135 = vsel %vm127, %v68, 0
    %137 = vmatpush.xpose.msra.mxu0 0.0
    %138 = vmatpush.xpose.msra.mxu0 0.0
    %139 = vmatpush.xpose.msra.mxu0 0.0
    %140 = vmatpush.xpose.msra.mxu0 0.0
    %141 = vmatpush.xpose.msra.mxu0 0.0
    %142 = vmatpush.xpose.msra.mxu0 0.0
    %143 = vmatpush.xpose.msra.mxu0 0.0
    %144 = vmatpush.xpose.msra.mxu0 0.0
    %145 = vmatpush.xpose.msra.mxu0 0.0
    %146 = vmatpush.xpose.msra.mxu0 0.0
    %147 = vmatpush.xpose.msra.mxu0 0.0
    %148 = vmatpush.xpose.msra.mxu0 0.0
    %149 = vmatpush.xpose.msra.mxu0 0.0
    %150 = vmatpush.xpose.msra.mxu0 0.0
    %151 = vmatpush.xpose.msra.mxu0 0.0
    %152 = vmatpush.xpose.msra.mxu0 %v135
    %153 = vmatmul.f32.gmra.mxu0 %v129
    %v154 = vpop.f32.mrf.mxu0
    %v155 = vadd.f32 %v80, %v154
    %156 = vmatmul.f32.gmra.mxu0 %v132
    %v157 = vpop.f32.mrf.mxu0
    %v158 = vadd.f32 %v81, %v157
    %159 = vdwg.mxu0
    %v161 = vsel %vm127, %v69, 0
    %163 = vmatpush.xpose.msra.mxu0 0.0
    %164 = vmatpush.xpose.msra.mxu0 0.0
    %165 = vmatpush.xpose.msra.mxu0 0.0
    %166 = vmatpush.xpose.msra.mxu0 0.0
    %167 = vmatpush.xpose.msra.mxu0 0.0
    %168 = vmatpush.xpose.msra.mxu0 0.0
    %169 = vmatpush.xpose.msra.mxu0 0.0
    %170 = vmatpush.xpose.msra.mxu0 0.0
    %171 = vmatpush.xpose.msra.mxu0 0.0
    %172 = vmatpush.xpose.msra.mxu0 0.0
    %173 = vmatpush.xpose.msra.mxu0 0.0
    %174 = vmatpush.xpose.msra.mxu0 0.0
    %175 = vmatpush.xpose.msra.mxu0 0.0
    %176 = vmatpush.xpose.msra.mxu0 0.0
    %177 = vmatpush.xpose.msra.mxu0 0.0
    %178 = vmatpush.xpose.msra.mxu0 %v161
    %179 = vmatmul.f32.gmra.mxu0 %v129
    %v180 = vpop.f32.mrf.mxu0
    %v181 = vadd.f32 %v82, %v180
    %182 = vmatmul.f32.gmra.mxu0 %v132
    %v183 = vpop.f32.mrf.mxu0
    %v184 = vadd.f32 %v83, %v183
    %185 = vdwg.mxu0
    %v187 = vsel %vm127, %v70, 0
    %189 = vmatpush.xpose.msra.mxu0 0.0
    %190 = vmatpush.xpose.msra.mxu0 0.0
    %191 = vmatpush.xpose.msra.mxu0 0.0
    %192 = vmatpush.xpose.msra.mxu0 0.0
    %193 = vmatpush.xpose.msra.mxu0 0.0
    %194 = vmatpush.xpose.msra.mxu0 0.0
    %195 = vmatpush.xpose.msra.mxu0 0.0
    %196 = vmatpush.xpose.msra.mxu0 0.0
    %197 = vmatpush.xpose.msra.mxu0 0.0
    %198 = vmatpush.xpose.msra.mxu0 0.0
    %199 = vmatpush.xpose.msra.mxu0 0.0
    %200 = vmatpush.xpose.msra.mxu0 0.0
    %201 = vmatpush.xpose.msra.mxu0 0.0
    %202 = vmatpush.xpose.msra.mxu0 0.0
    %203 = vmatpush.xpose.msra.mxu0 0.0
    %204 = vmatpush.xpose.msra.mxu0 %v187
    %205 = vmatmul.f32.gmra.mxu0 %v129
    %v206 = vpop.f32.mrf.mxu0
    %v207 = vadd.f32 %v84, %v206
    %208 = vmatmul.f32.gmra.mxu0 %v132
    %v209 = vpop.f32.mrf.mxu0
    %v210 = vadd.f32 %v85, %v209
    %211 = vdwg.mxu0
    %v213 = vsel %vm127, %v71, 0
    %215 = vmatpush.xpose.msra.mxu0 0.0
    %216 = vmatpush.xpose.msra.mxu0 0.0
    %217 = vmatpush.xpose.msra.mxu0 0.0
    %218 = vmatpush.xpose.msra.mxu0 0.0
    %219 = vmatpush.xpose.msra.mxu0 0.0
    %220 = vmatpush.xpose.msra.mxu0 0.0
    %221 = vmatpush.xpose.msra.mxu0 0.0
    %222 = vmatpush.xpose.msra.mxu0 0.0
    %223 = vmatpush.xpose.msra.mxu0 0.0
    %224 = vmatpush.xpose.msra.mxu0 0.0
    %225 = vmatpush.xpose.msra.mxu0 0.0
    %226 = vmatpush.xpose.msra.mxu0 0.0
    %227 = vmatpush.xpose.msra.mxu0 0.0
    %228 = vmatpush.xpose.msra.mxu0 0.0
    %229 = vmatpush.xpose.msra.mxu0 0.0
    %230 = vmatpush.xpose.msra.mxu0 %v213
    %231 = vmatmul.f32.gmra.mxu0 %v129
    %v232 = vpop.f32.mrf.mxu0
    %v233 = vadd.f32 %v86, %v232
    %234 = vmatmul.f32.gmra.mxu0 %v132
    %v235 = vpop.f32.mrf.mxu0
    %v236 = vadd.f32 %v87, %v235
    %237 = vdwg.mxu0
    %v239 = vsel %vm127, %v72, 0
    %241 = vmatpush.xpose.msra.mxu0 0.0
    %242 = vmatpush.xpose.msra.mxu0 0.0
    %243 = vmatpush.xpose.msra.mxu0 0.0
    %244 = vmatpush.xpose.msra.mxu0 0.0
    %245 = vmatpush.xpose.msra.mxu0 0.0
    %246 = vmatpush.xpose.msra.mxu0 0.0
    %247 = vmatpush.xpose.msra.mxu0 0.0
    %248 = vmatpush.xpose.msra.mxu0 0.0
    %249 = vmatpush.xpose.msra.mxu0 0.0
    %250 = vmatpush.xpose.msra.mxu0 0.0
    %251 = vmatpush.xpose.msra.mxu0 0.0
    %252 = vmatpush.xpose.msra.mxu0 0.0
    %253 = vmatpush.xpose.msra.mxu0 0.0
    %254 = vmatpush.xpose.msra.mxu0 0.0
    %255 = vmatpush.xpose.msra.mxu0 0.0
    %256 = vmatpush.xpose.msra.mxu0 %v239
    %257 = vmatmul.f32.gmra.mxu0 %v129
    %v258 = vpop.f32.mrf.mxu0
    %v259 = vadd.f32 %v88, %v258
    %260 = vmatmul.f32.gmra.mxu0 %v132
    %v261 = vpop.f32.mrf.mxu0
    %v262 = vadd.f32 %v89, %v261
    %263 = vdwg.mxu0
    %v265 = vsel %vm127, %v73, 0
    %267 = vmatpush.xpose.msra.mxu0 0.0
    %268 = vmatpush.xpose.msra.mxu0 0.0
    %269 = vmatpush.xpose.msra.mxu0 0.0
    %270 = vmatpush.xpose.msra.mxu0 0.0
    %271 = vmatpush.xpose.msra.mxu0 0.0
    %272 = vmatpush.xpose.msra.mxu0 0.0
    %273 = vmatpush.xpose.msra.mxu0 0.0
    %274 = vmatpush.xpose.msra.mxu0 0.0
    %275 = vmatpush.xpose.msra.mxu0 0.0
    %276 = vmatpush.xpose.msra.mxu0 0.0
    %277 = vmatpush.xpose.msra.mxu0 0.0
    %278 = vmatpush.xpose.msra.mxu0 0.0
    %279 = vmatpush.xpose.msra.mxu0 0.0
    %280 = vmatpush.xpose.msra.mxu0 0.0
    %281 = vmatpush.xpose.msra.mxu0 0.0
    %282 = vmatpush.xpose.msra.mxu0 %v265
    %283 = vmatmul.f32.gmra.mxu0 %v129
    %v284 = vpop.f32.mrf.mxu0
    %v285 = vadd.f32 %v90, %v284
    %286 = vmatmul.f32.gmra.mxu0 %v132
    %v287 = vpop.f32.mrf.mxu0
    %v288 = vadd.f32 %v91, %v287
    %289 = vdwg.mxu0
    %v291 = vsel %vm127, %v74, 0
    %293 = vmatpush.xpose.msra.mxu0 0.0
    %294 = vmatpush.xpose.msra.mxu0 0.0
    %295 = vmatpush.xpose.msra.mxu0 0.0
    %296 = vmatpush.xpose.msra.mxu0 0.0
    %297 = vmatpush.xpose.msra.mxu0 0.0
    %298 = vmatpush.xpose.msra.mxu0 0.0
    %299 = vmatpush.xpose.msra.mxu0 0.0
    %300 = vmatpush.xpose.msra.mxu0 0.0
    %301 = vmatpush.xpose.msra.mxu0 0.0
    %302 = vmatpush.xpose.msra.mxu0 0.0
    %303 = vmatpush.xpose.msra.mxu0 0.0
    %304 = vmatpush.xpose.msra.mxu0 0.0
    %305 = vmatpush.xpose.msra.mxu0 0.0
    %306 = vmatpush.xpose.msra.mxu0 0.0
    %307 = vmatpush.xpose.msra.mxu0 0.0
    %308 = vmatpush.xpose.msra.mxu0 %v291
    %309 = vmatmul.f32.gmra.mxu0 %v129
    %v310 = vpop.f32.mrf.mxu0
    %v311 = vadd.f32 %v92, %v310
    %312 = vmatmul.f32.gmra.mxu0 %v132
    %v313 = vpop.f32.mrf.mxu0
    %v314 = vadd.f32 %v93, %v313
    %315 = vdwg.mxu0
    %v317 = vsel %vm127, %v75, 0
    %319 = vmatpush.xpose.msra.mxu0 0.0
    %320 = vmatpush.xpose.msra.mxu0 0.0
    %321 = vmatpush.xpose.msra.mxu0 0.0
    %322 = vmatpush.xpose.msra.mxu0 0.0
    %323 = vmatpush.xpose.msra.mxu0 0.0
    %324 = vmatpush.xpose.msra.mxu0 0.0
    %325 = vmatpush.xpose.msra.mxu0 0.0
    %326 = vmatpush.xpose.msra.mxu0 0.0
    %327 = vmatpush.xpose.msra.mxu0 0.0
    %328 = vmatpush.xpose.msra.mxu0 0.0
    %329 = vmatpush.xpose.msra.mxu0 0.0
    %330 = vmatpush.xpose.msra.mxu0 0.0
    %331 = vmatpush.xpose.msra.mxu0 0.0
    %332 = vmatpush.xpose.msra.mxu0 0.0
    %333 = vmatpush.xpose.msra.mxu0 0.0
    %334 = vmatpush.xpose.msra.mxu0 %v317
    %335 = vmatmul.f32.gmra.mxu0 %v129
    %v336 = vpop.f32.mrf.mxu0
    %v337 = vadd.f32 %v94, %v336
    %338 = vmatmul.f32.gmra.mxu0 %v132
    %v339 = vpop.f32.mrf.mxu0
    %v340 = vadd.f32 %v95, %v339
    %341 = vdwg.mxu0
    %v343 = vsel %vm127, %v76, 0
    %345 = vmatpush.xpose.msra.mxu0 0.0
    %346 = vmatpush.xpose.msra.mxu0 0.0
    %347 = vmatpush.xpose.msra.mxu0 0.0
    %348 = vmatpush.xpose.msra.mxu0 0.0
    %349 = vmatpush.xpose.msra.mxu0 0.0
    %350 = vmatpush.xpose.msra.mxu0 0.0
    %351 = vmatpush.xpose.msra.mxu0 0.0
    %352 = vmatpush.xpose.msra.mxu0 0.0
    %353 = vmatpush.xpose.msra.mxu0 0.0
    %354 = vmatpush.xpose.msra.mxu0 0.0
    %355 = vmatpush.xpose.msra.mxu0 0.0
    %356 = vmatpush.xpose.msra.mxu0 0.0
    %357 = vmatpush.xpose.msra.mxu0 0.0
    %358 = vmatpush.xpose.msra.mxu0 0.0
    %359 = vmatpush.xpose.msra.mxu0 0.0
    %360 = vmatpush.xpose.msra.mxu0 %v343
    %361 = vmatmul.f32.gmra.mxu0 %v129
    %v362 = vpop.f32.mrf.mxu0
    %v363 = vadd.f32 %v96, %v362
    %364 = vmatmul.f32.gmra.mxu0 %v132
    %v365 = vpop.f32.mrf.mxu0
    %v366 = vadd.f32 %v97, %v365
    %367 = vdwg.mxu0
    %v369 = vsel %vm127, %v77, 0
    %371 = vmatpush.xpose.msra.mxu0 0.0
    %372 = vmatpush.xpose.msra.mxu0 0.0
    %373 = vmatpush.xpose.msra.mxu0 0.0
    %374 = vmatpush.xpose.msra.mxu0 0.0
    %375 = vmatpush.xpose.msra.mxu0 0.0
    %376 = vmatpush.xpose.msra.mxu0 0.0
    %377 = vmatpush.xpose.msra.mxu0 0.0
    %378 = vmatpush.xpose.msra.mxu0 0.0
    %379 = vmatpush.xpose.msra.mxu0 0.0
    %380 = vmatpush.xpose.msra.mxu0 0.0
    %381 = vmatpush.xpose.msra.mxu0 0.0
    %382 = vmatpush.xpose.msra.mxu0 0.0
    %383 = vmatpush.xpose.msra.mxu0 0.0
    %384 = vmatpush.xpose.msra.mxu0 0.0
    %385 = vmatpush.xpose.msra.mxu0 0.0
    %386 = vmatpush.xpose.msra.mxu0 %v369
    %387 = vmatmul.f32.gmra.mxu0 %v129
    %v388 = vpop.f32.mrf.mxu0
    %v389 = vadd.f32 %v98, %v388
    %390 = vmatmul.f32.gmra.mxu0 %v132
    %v391 = vpop.f32.mrf.mxu0
    %v392 = vadd.f32 %v99, %v391
    %393 = vdwg.mxu0
    %v395 = vsel %vm127, %v78, 0
    %397 = vmatpush.xpose.msra.mxu0 0.0
    %398 = vmatpush.xpose.msra.mxu0 0.0
    %399 = vmatpush.xpose.msra.mxu0 0.0
    %400 = vmatpush.xpose.msra.mxu0 0.0
    %401 = vmatpush.xpose.msra.mxu0 0.0
    %402 = vmatpush.xpose.msra.mxu0 0.0
    %403 = vmatpush.xpose.msra.mxu0 0.0
    %404 = vmatpush.xpose.msra.mxu0 0.0
    %405 = vmatpush.xpose.msra.mxu0 0.0
    %406 = vmatpush.xpose.msra.mxu0 0.0
    %407 = vmatpush.xpose.msra.mxu0 0.0
    %408 = vmatpush.xpose.msra.mxu0 0.0
    %409 = vmatpush.xpose.msra.mxu0 0.0
    %410 = vmatpush.xpose.msra.mxu0 0.0
    %411 = vmatpush.xpose.msra.mxu0 0.0
    %412 = vmatpush.xpose.msra.mxu0 %v395
    %413 = vmatmul.f32.gmra.mxu0 %v129
    %v414 = vpop.f32.mrf.mxu0
    %v415 = vadd.f32 %v100, %v414
    %416 = vmatmul.f32.gmra.mxu0 %v132
    %v417 = vpop.f32.mrf.mxu0
    %v418 = vadd.f32 %v101, %v417
    %419 = vdwg.mxu0
    %v421 = vsel %vm127, %v79, 0
    %423 = vmatpush.xpose.msra.mxu0 0.0
    %424 = vmatpush.xpose.msra.mxu0 0.0
    %425 = vmatpush.xpose.msra.mxu0 0.0
    %426 = vmatpush.xpose.msra.mxu0 0.0
    %427 = vmatpush.xpose.msra.mxu0 0.0
    %428 = vmatpush.xpose.msra.mxu0 0.0
    %429 = vmatpush.xpose.msra.mxu0 0.0
    %430 = vmatpush.xpose.msra.mxu0 0.0
    %431 = vmatpush.xpose.msra.mxu0 0.0
    %432 = vmatpush.xpose.msra.mxu0 0.0
    %433 = vmatpush.xpose.msra.mxu0 0.0
    %434 = vmatpush.xpose.msra.mxu0 0.0
    %435 = vmatpush.xpose.msra.mxu0 0.0
    %436 = vmatpush.xpose.msra.mxu0 0.0
    %437 = vmatpush.xpose.msra.mxu0 0.0
    %438 = vmatpush.xpose.msra.mxu0 %v421
    %439 = vmatmul.f32.gmra.mxu0 %v129
    %v440 = vpop.f32.mrf.mxu0
    %v441 = vadd.f32 %v102, %v440
    %442 = vmatmul.f32.gmra.mxu0 %v132
    %v443 = vpop.f32.mrf.mxu0
    %v444 = vadd.f32 %v103, %v443
    %445 = vdwg.mxu0
    %vm446 = vcmask 64512
    %v448 = vsel %vm446, %v155, 0
    %v451 = vsel %vm446, %v158, 0
    %v454 = vsel %vm446, %v259, 0
    %v457 = vsel %vm446, %v262, 0
    %459 = vmatpush.xpose.msra.mxu0 0.0
    %460 = vmatpush.xpose.msra.mxu0 0.0
    %461 = vmatpush.xpose.msra.mxu0 0.0
    %462 = vmatpush.xpose.msra.mxu0 0.0
    %463 = vmatpush.xpose.msra.mxu0 0.0
    %464 = vmatpush.xpose.msra.mxu0 0.0
    %465 = vmatpush.xpose.msra.mxu0 0.0
    %466 = vmatpush.xpose.msra.mxu0 0.0
    %467 = vmatpush.xpose.msra.mxu0 0.0
    %468 = vmatpush.xpose.msra.mxu0 0.0
    %469 = vmatpush.xpose.msra.mxu0 0.0
    %470 = vmatpush.xpose.msra.mxu0 0.0
    %471 = vmatpush.xpose.msra.mxu0 0.0
    %472 = vmatpush.xpose.msra.mxu0 0.0
    %473 = vmatpush.xpose.msra.mxu0 %v457
    %474 = vmatpush.xpose.msra.mxu0 %v454
    %475 = vmatmul.f32.gmra.mxu0 %v448
    %v476 = vpop.f32.mrf.mxu0
    %v477 = vadd.f32 %v66, %v476
    %478 = vmatmul.f32.gmra.mxu0 %v451
    %v479 = vpop.f32.mrf.mxu0
    %v480 = vadd.f32 %v67, %v479
    %481 = vdwg.mxu0
    %v483 = vsel %vm446, %v181, 0
    %v486 = vsel %vm446, %v184, 0
    %v489 = vsel %vm446, %v285, 0
    %v492 = vsel %vm446, %v288, 0
    %494 = vmatpush.xpose.msra.mxu0 0.0
    %495 = vmatpush.xpose.msra.mxu0 0.0
    %496 = vmatpush.xpose.msra.mxu0 0.0
    %497 = vmatpush.xpose.msra.mxu0 0.0
    %498 = vmatpush.xpose.msra.mxu0 0.0
    %499 = vmatpush.xpose.msra.mxu0 0.0
    %500 = vmatpush.xpose.msra.mxu0 0.0
    %501 = vmatpush.xpose.msra.mxu0 0.0
    %502 = vmatpush.xpose.msra.mxu0 0.0
    %503 = vmatpush.xpose.msra.mxu0 0.0
    %504 = vmatpush.xpose.msra.mxu0 0.0
    %505 = vmatpush.xpose.msra.mxu0 0.0
    %506 = vmatpush.xpose.msra.mxu0 0.0
    %507 = vmatpush.xpose.msra.mxu0 0.0
    %508 = vmatpush.xpose.msra.mxu0 %v492
    %509 = vmatpush.xpose.msra.mxu0 %v489
    %510 = vmatmul.f32.gmra.mxu0 %v483
    %v511 = vpop.f32.mrf.mxu0
    %v512 = vadd.f32 %v66, %v511
    %513 = vmatmul.f32.gmra.mxu0 %v486
    %v514 = vpop.f32.mrf.mxu0
    %v515 = vadd.f32 %v67, %v514
    %516 = vdwg.mxu0
    %v518 = vsel %vm446, %v207, 0
    %v521 = vsel %vm446, %v210, 0
    %v524 = vsel %vm446, %v311, 0
    %v527 = vsel %vm446, %v314, 0
    %529 = vmatpush.xpose.msra.mxu0 0.0
    %530 = vmatpush.xpose.msra.mxu0 0.0
    %531 = vmatpush.xpose.msra.mxu0 0.0
    %532 = vmatpush.xpose.msra.mxu0 0.0
    %533 = vmatpush.xpose.msra.mxu0 0.0
    %534 = vmatpush.xpose.msra.mxu0 0.0
    %535 = vmatpush.xpose.msra.mxu0 0.0
    %536 = vmatpush.xpose.msra.mxu0 0.0
    %537 = vmatpush.xpose.msra.mxu0 0.0
    %538 = vmatpush.xpose.msra.mxu0 0.0
    %539 = vmatpush.xpose.msra.mxu0 0.0
    %540 = vmatpush.xpose.msra.mxu0 0.0
    %541 = vmatpush.xpose.msra.mxu0 0.0
    %542 = vmatpush.xpose.msra.mxu0 0.0
    %543 = vmatpush.xpose.msra.mxu0 %v527
    %544 = vmatpush.xpose.msra.mxu0 %v524
    %545 = vmatmul.f32.gmra.mxu0 %v518
    %v546 = vpop.f32.mrf.mxu0
    %v547 = vadd.f32 %v66, %v546
    %548 = vmatmul.f32.gmra.mxu0 %v521
    %v549 = vpop.f32.mrf.mxu0
    %v550 = vadd.f32 %v67, %v549
    %551 = vdwg.mxu0
    %v553 = vsel %vm446, %v233, 0
    %v556 = vsel %vm446, %v236, 0
    %v559 = vsel %vm446, %v337, 0
    %v562 = vsel %vm446, %v340, 0
    %564 = vmatpush.xpose.msra.mxu0 0.0
    %565 = vmatpush.xpose.msra.mxu0 0.0
    %566 = vmatpush.xpose.msra.mxu0 0.0
    %567 = vmatpush.xpose.msra.mxu0 0.0
    %568 = vmatpush.xpose.msra.mxu0 0.0
    %569 = vmatpush.xpose.msra.mxu0 0.0
    %570 = vmatpush.xpose.msra.mxu0 0.0
    %571 = vmatpush.xpose.msra.mxu0 0.0
    %572 = vmatpush.xpose.msra.mxu0 0.0
    %573 = vmatpush.xpose.msra.mxu0 0.0
    %574 = vmatpush.xpose.msra.mxu0 0.0
    %575 = vmatpush.xpose.msra.mxu0 0.0
    %576 = vmatpush.xpose.msra.mxu0 0.0
    %577 = vmatpush.xpose.msra.mxu0 0.0
    %578 = vmatpush.xpose.msra.mxu0 %v562
    %579 = vmatpush.xpose.msra.mxu0 %v559
    %580 = vmatmul.f32.gmra.mxu0 %v553
    %v581 = vpop.f32.mrf.mxu0
    %v582 = vadd.f32 %v66, %v581
    %583 = vmatmul.f32.gmra.mxu0 %v556
    %v584 = vpop.f32.mrf.mxu0
    %v585 = vadd.f32 %v67, %v584
    %586 = vdwg.mxu0
    %vm587 = vcmask 130048
    %v588 = vsel %vm587, %v477, -inf
    %589 = vmax.xlane.f32.xlu0 %v588
    %v590 = vpop.xlane.xlu0 %589
    %v591 = vsel %vm587, %v480, -inf
    %592 = vmax.xlane.f32.xlu0 %v591
    %v593 = vpop.xlane.xlu0 %592
    %v594 = vsel %vm587, %v512, -inf
    %595 = vmax.xlane.f32.xlu0 %v594
    %v596 = vpop.xlane.xlu0 %595
    %v597 = vsel %vm587, %v515, -inf
    %598 = vmax.xlane.f32.xlu0 %v597
    %v599 = vpop.xlane.xlu0 %598
    %v600 = vsel %vm587, %v547, -inf
    %601 = vmax.xlane.f32.xlu0 %v600
    %v602 = vpop.xlane.xlu0 %601
    %v603 = vsel %vm587, %v550, -inf
    %604 = vmax.xlane.f32.xlu0 %v603
    %v605 = vpop.xlane.xlu0 %604
    %v606 = vsel %vm587, %v582, -inf
    %607 = vmax.xlane.f32.xlu0 %v606
    %v608 = vpop.xlane.xlu0 %607
    %v609 = vsel %vm587, %v585, -inf
    %610 = vmax.xlane.f32.xlu0 %v609
    %v611 = vpop.xlane.xlu0 %610
    %v612 = vsub.f32 %v477, %v590
    %v613 = vsub.f32 %v480, %v593
    %v614 = vsub.f32 %v512, %v596
    %v615 = vsub.f32 %v515, %v599
    %v616 = vsub.f32 %v547, %v602
    %v617 = vsub.f32 %v550, %v605
    %v618 = vsub.f32 %v582, %v608
    %v619 = vsub.f32 %v585, %v611
    %v620 = vmul.f32 %v612, 1.442695
    %v621 = vpow.pop %v620
    %v622 = vmul.f32 %v613, 1.442695
    %v623 = vpow.pop %v622
    %v624 = vmul.f32 %v614, 1.442695
    %v625 = vpow.pop %v624
    %v626 = vmul.f32 %v615, 1.442695
    %v627 = vpow.pop %v626
    %v628 = vmul.f32 %v616, 1.442695
    %v629 = vpow.pop %v628
    %v630 = vmul.f32 %v617, 1.442695
    %v631 = vpow.pop %v630
    %v632 = vmul.f32 %v618, 1.442695
    %v633 = vpow.pop %v632
    %v634 = vmul.f32 %v619, 1.442695
    %v635 = vpow.pop %v634
    %v636 = vsel %vm587, %v621, 0.0
    %637 = vadd.xlane.f32.xlu0 %v636
    %v638 = vpop.xlane.xlu0 %637
    %v639 = vsel %vm587, %v623, 0.0
    %640 = vadd.xlane.f32.xlu0 %v639
    %v641 = vpop.xlane.xlu0 %640
    %v642 = vsel %vm587, %v625, 0.0
    %643 = vadd.xlane.f32.xlu0 %v642
    %v644 = vpop.xlane.xlu0 %643
    %v645 = vsel %vm587, %v627, 0.0
    %646 = vadd.xlane.f32.xlu0 %v645
    %v647 = vpop.xlane.xlu0 %646
    %v648 = vsel %vm587, %v629, 0.0
    %649 = vadd.xlane.f32.xlu0 %v648
    %v650 = vpop.xlane.xlu0 %649
    %v651 = vsel %vm587, %v631, 0.0
    %652 = vadd.xlane.f32.xlu0 %v651
    %v653 = vpop.xlane.xlu0 %652
    %v654 = vsel %vm587, %v633, 0.0
    %655 = vadd.xlane.f32.xlu0 %v654
    %v656 = vpop.xlane.xlu0 %655
    %v657 = vsel %vm587, %v635, 0.0
    %658 = vadd.xlane.f32.xlu0 %v657
    %v659 = vpop.xlane.xlu0 %658
    %v660 = vrcp.pop %v638
    %v661 = vmul.f32 %v638, %v660
    %v662 = vsub.f32 1.0, %v661
    %v663 = vmul.f32 %v660, %v662
    %v664 = vadd.f32 %v660, %v663
    %vm665 = vweird.f32 %v638
    %vm666 = vweird.f32 %v660
    %vm667 = vmor %vm665, %vm666
    %v668 = vsel %vm667, %v660, %v664
    %v669 = vand.u32 2147483647, %v638
    %vm670 = vcmp.eq.f32.partialorder %v669, 8.507059e+37
    %v671 = vand.u32 %v638, 2147483648
    %v672 = vor.u32 1.1754944e-38, %v671
    %v673 = vsel %vm670, %v672, %v668
    %v674 = vmul.f32 %v621, %v673
    %v675 = vrcp.pop %v641
    %v676 = vmul.f32 %v641, %v675
    %v677 = vsub.f32 1.0, %v676
    %v678 = vmul.f32 %v675, %v677
    %v679 = vadd.f32 %v675, %v678
    %vm680 = vweird.f32 %v641
    %vm681 = vweird.f32 %v675
    %vm682 = vmor %vm680, %vm681
    %v683 = vsel %vm682, %v675, %v679
    %v684 = vand.u32 2147483647, %v641
    %vm685 = vcmp.eq.f32.partialorder %v684, 8.507059e+37
    %v686 = vand.u32 %v641, 2147483648
    %v687 = vor.u32 1.1754944e-38, %v686
    %v688 = vsel %vm685, %v687, %v683
    %v689 = vmul.f32 %v623, %v688
    %v690 = vrcp.pop %v644
    %v691 = vmul.f32 %v644, %v690
    %v692 = vsub.f32 1.0, %v691
    %v693 = vmul.f32 %v690, %v692
    %v694 = vadd.f32 %v690, %v693
    %vm695 = vweird.f32 %v644
    %vm696 = vweird.f32 %v690
    %vm697 = vmor %vm695, %vm696
    %v698 = vsel %vm697, %v690, %v694
    %v699 = vand.u32 2147483647, %v644
    %vm700 = vcmp.eq.f32.partialorder %v699, 8.507059e+37
    %v701 = vand.u32 %v644, 2147483648
    %v702 = vor.u32 1.1754944e-38, %v701
    %v703 = vsel %vm700, %v702, %v698
    %v704 = vmul.f32 %v625, %v703
    %v705 = vrcp.pop %v647
    %v706 = vmul.f32 %v647, %v705
    %v707 = vsub.f32 1.0, %v706
    %v708 = vmul.f32 %v705, %v707
    %v709 = vadd.f32 %v705, %v708
    %vm710 = vweird.f32 %v647
    %vm711 = vweird.f32 %v705
    %vm712 = vmor %vm710, %vm711
    %v713 = vsel %vm712, %v705, %v709
    %v714 = vand.u32 2147483647, %v647
    %vm715 = vcmp.eq.f32.partialorder %v714, 8.507059e+37
    %v716 = vand.u32 %v647, 2147483648
    %v717 = vor.u32 1.1754944e-38, %v716
    %v718 = vsel %vm715, %v717, %v713
    %v719 = vmul.f32 %v627, %v718
    %v720 = vrcp.pop %v650
    %v721 = vmul.f32 %v650, %v720
    %v722 = vsub.f32 1.0, %v721
    %v723 = vmul.f32 %v720, %v722
    %v724 = vadd.f32 %v720, %v723
    %vm725 = vweird.f32 %v650
    %vm726 = vweird.f32 %v720
    %vm727 = vmor %vm725, %vm726
    %v728 = vsel %vm727, %v720, %v724
    %v729 = vand.u32 2147483647, %v650
    %vm730 = vcmp.eq.f32.partialorder %v729, 8.507059e+37
    %v731 = vand.u32 %v650, 2147483648
    %v732 = vor.u32 1.1754944e-38, %v731
    %v733 = vsel %vm730, %v732, %v728
    %v734 = vmul.f32 %v629, %v733
    %v735 = vrcp.pop %v653
    %v736 = vmul.f32 %v653, %v735
    %v737 = vsub.f32 1.0, %v736
    %v738 = vmul.f32 %v735, %v737
    %v739 = vadd.f32 %v735, %v738
    %vm740 = vweird.f32 %v653
    %vm741 = vweird.f32 %v735
    %vm742 = vmor %vm740, %vm741
    %v743 = vsel %vm742, %v735, %v739
    %v744 = vand.u32 2147483647, %v653
    %vm745 = vcmp.eq.f32.partialorder %v744, 8.507059e+37
    %v746 = vand.u32 %v653, 2147483648
    %v747 = vor.u32 1.1754944e-38, %v746
    %v748 = vsel %vm745, %v747, %v743
    %v749 = vmul.f32 %v631, %v748
    %v750 = vrcp.pop %v656
    %v751 = vmul.f32 %v656, %v750
    %v752 = vsub.f32 1.0, %v751
    %v753 = vmul.f32 %v750, %v752
    %v754 = vadd.f32 %v750, %v753
    %vm755 = vweird.f32 %v656
    %vm756 = vweird.f32 %v750
    %vm757 = vmor %vm755, %vm756
    %v758 = vsel %vm757, %v750, %v754
    %v759 = vand.u32 2147483647, %v656
    %vm760 = vcmp.eq.f32.partialorder %v759, 8.507059e+37
    %v761 = vand.u32 %v656, 2147483648
    %v762 = vor.u32 1.1754944e-38, %v761
    %v763 = vsel %vm760, %v762, %v758
    %v764 = vmul.f32 %v633, %v763
    %v765 = vrcp.pop %v659
    %v766 = vmul.f32 %v659, %v765
    %v767 = vsub.f32 1.0, %v766
    %v768 = vmul.f32 %v765, %v767
    %v769 = vadd.f32 %v765, %v768
    %vm770 = vweird.f32 %v659
    %vm771 = vweird.f32 %v765
    %vm772 = vmor %vm770, %vm771
    %v773 = vsel %vm772, %v765, %v769
    %v774 = vand.u32 2147483647, %v659
    %vm775 = vcmp.eq.f32.partialorder %v774, 8.507059e+37
    %v776 = vand.u32 %v659, 2147483648
    %v777 = vor.u32 1.1754944e-38, %v776
    %v778 = vsel %vm775, %v777, %v773
    %v779 = vmul.f32 %v635, %v778
    %v781 = vsel %vm587, %v674, 0
    %v784 = vsel %vm587, %v689, 0
    %786 = vmatpush.msra.mxu0 0.0
    %787 = vmatpush.msra.mxu0 0.0
    %788 = vmatpush.msra.mxu0 0.0
    %789 = vmatpush.msra.mxu0 0.0
    %790 = vmatpush.msra.mxu0 0.0
    %791 = vmatpush.msra.mxu0 0.0
    %792 = vmatpush.msra.mxu0 0.0
    %793 = vmatpush.msra.mxu0 0.0
    %794 = vmatpush.msra.mxu0 0.0
    %795 = vmatpush.msra.mxu0 0.0
    %796 = vmatpush.msra.mxu0 0.0
    %797 = vmatpush.msra.mxu0 0.0
    %798 = vmatpush.msra.mxu0 0.0
    %799 = vmatpush.msra.mxu0 0.0
    %800 = vmatpush.msra.mxu0 %v366
    %801 = vmatpush.msra.mxu0 %v363
    %802 = vmatmul.f32.gmra.mxu0 %v781
    %v803 = vpop.f32.mrf.mxu0
    %v804 = vadd.f32 0.0, %v803
    %805 = vmatmul.f32.gmra.mxu0 %v784
    %v806 = vpop.f32.mrf.mxu0
    %v807 = vadd.f32 0.0, %v806
    %808 = vdwg.mxu0
    %v810 = vsel %vm587, %v704, 0
    %v813 = vsel %vm587, %v719, 0
    %815 = vmatpush.msra.mxu0 0.0
    %816 = vmatpush.msra.mxu0 0.0
    %817 = vmatpush.msra.mxu0 0.0
    %818 = vmatpush.msra.mxu0 0.0
    %819 = vmatpush.msra.mxu0 0.0
    %820 = vmatpush.msra.mxu0 0.0
    %821 = vmatpush.msra.mxu0 0.0
    %822 = vmatpush.msra.mxu0 0.0
    %823 = vmatpush.msra.mxu0 0.0
    %824 = vmatpush.msra.mxu0 0.0
    %825 = vmatpush.msra.mxu0 0.0
    %826 = vmatpush.msra.mxu0 0.0
    %827 = vmatpush.msra.mxu0 0.0
    %828 = vmatpush.msra.mxu0 0.0
    %829 = vmatpush.msra.mxu0 %v392
    %830 = vmatpush.msra.mxu0 %v389
    %831 = vmatmul.f32.gmra.mxu0 %v810
    %v832 = vpop.f32.mrf.mxu0
    %v833 = vadd.f32 0.0, %v832
    %834 = vmatmul.f32.gmra.mxu0 %v813
    %v835 = vpop.f32.mrf.mxu0
    %v836 = vadd.f32 0.0, %v835
    %837 = vdwg.mxu0
    %v839 = vsel %vm587, %v734, 0
    %v842 = vsel %vm587, %v749, 0
    %844 = vmatpush.msra.mxu0 0.0
    %845 = vmatpush.msra.mxu0 0.0
    %846 = vmatpush.msra.mxu0 0.0
    %847 = vmatpush.msra.mxu0 0.0
    %848 = vmatpush.msra.mxu0 0.0
    %849 = vmatpush.msra.mxu0 0.0
    %850 = vmatpush.msra.mxu0 0.0
    %851 = vmatpush.msra.mxu0 0.0
    %852 = vmatpush.msra.mxu0 0.0
    %853 = vmatpush.msra.mxu0 0.0
    %854 = vmatpush.msra.mxu0 0.0
    %855 = vmatpush.msra.mxu0 0.0
    %856 = vmatpush.msra.mxu0 0.0
    %857 = vmatpush.msra.mxu0 0.0
    %858 = vmatpush.msra.mxu0 %v418
    %859 = vmatpush.msra.mxu0 %v415
    %860 = vmatmul.f32.gmra.mxu0 %v839
    %v861 = vpop.f32.mrf.mxu0
    %v862 = vadd.f32 0.0, %v861
    %863 = vmatmul.f32.gmra.mxu0 %v842
    %v864 = vpop.f32.mrf.mxu0
    %v865 = vadd.f32 0.0, %v864
    %866 = vdwg.mxu0
    %v868 = vsel %vm587, %v764, 0
    %v871 = vsel %vm587, %v779, 0
    %873 = vmatpush.msra.mxu0 0.0
    %874 = vmatpush.msra.mxu0 0.0
    %875 = vmatpush.msra.mxu0 0.0
    %876 = vmatpush.msra.mxu0 0.0
    %877 = vmatpush.msra.mxu0 0.0
    %878 = vmatpush.msra.mxu0 0.0
    %879 = vmatpush.msra.mxu0 0.0
    %880 = vmatpush.msra.mxu0 0.0
    %881 = vmatpush.msra.mxu0 0.0
    %882 = vmatpush.msra.mxu0 0.0
    %883 = vmatpush.msra.mxu0 0.0
    %884 = vmatpush.msra.mxu0 0.0
    %885 = vmatpush.msra.mxu0 0.0
    %886 = vmatpush.msra.mxu0 0.0
    %887 = vmatpush.msra.mxu0 %v444
    %888 = vmatpush.msra.mxu0 %v441
    %889 = vmatmul.f32.gmra.mxu0 %v868
    %v890 = vpop.f32.mrf.mxu0
    %v891 = vadd.f32 0.0, %v890
    %892 = vmatmul.f32.gmra.mxu0 %v871
    %v893 = vpop.f32.mrf.mxu0
    %v894 = vadd.f32 0.0, %v893
    %895 = vdwg.mxu0
    %v897 = vsel %vm446, %v804, 0
    %v900 = vsel %vm446, %v807, 0
    %902 = vmatpush.msra.mxu0 0.0
    %903 = vmatpush.msra.mxu0 0.0
    %904 = vmatpush.msra.mxu0 0.0
    %905 = vmatpush.msra.mxu0 0.0
    %906 = vmatpush.msra.mxu0 0.0
    %907 = vmatpush.msra.mxu0 0.0
    %908 = vmatpush.msra.mxu0 0.0
    %909 = vmatpush.msra.mxu0 0.0
    %910 = vmatpush.msra.mxu0 0.0
    %911 = vmatpush.msra.mxu0 0.0
    %912 = vmatpush.msra.mxu0 0.0
    %913 = vmatpush.msra.mxu0 0.0
    %914 = vmatpush.msra.mxu0 0.0
    %915 = vmatpush.msra.mxu0 0.0
    %916 = vmatpush.msra.mxu0 0.0
    %917 = vmatpush.msra.mxu0 %v104
    %918 = vmatmul.f32.gmra.mxu0 %v897
    %v919 = vpop.f32.mrf.mxu0
    %v920 = vadd.f32 0.0, %v919
    %921 = vmatmul.f32.gmra.mxu0 %v900
    %v922 = vpop.f32.mrf.mxu0
    %v923 = vadd.f32 0.0, %v922
    %924 = vdwg.mxu0
    %v926 = vsel %vm446, %v833, 0
    %v929 = vsel %vm446, %v836, 0
    %931 = vmatpush.msra.mxu0 0.0
    %932 = vmatpush.msra.mxu0 0.0
    %933 = vmatpush.msra.mxu0 0.0
    %934 = vmatpush.msra.mxu0 0.0
    %935 = vmatpush.msra.mxu0 0.0
    %936 = vmatpush.msra.mxu0 0.0
    %937 = vmatpush.msra.mxu0 0.0
    %938 = vmatpush.msra.mxu0 0.0
    %939 = vmatpush.msra.mxu0 0.0
    %940 = vmatpush.msra.mxu0 0.0
    %941 = vmatpush.msra.mxu0 0.0
    %942 = vmatpush.msra.mxu0 0.0
    %943 = vmatpush.msra.mxu0 0.0
    %944 = vmatpush.msra.mxu0 0.0
    %945 = vmatpush.msra.mxu0 0.0
    %946 = vmatpush.msra.mxu0 %v105
    %947 = vmatmul.f32.gmra.mxu0 %v926
    %v948 = vpop.f32.mrf.mxu0
    %v949 = vadd.f32 0.0, %v948
    %950 = vmatmul.f32.gmra.mxu0 %v929
    %v951 = vpop.f32.mrf.mxu0
    %v952 = vadd.f32 0.0, %v951
    %953 = vdwg.mxu0
    %v955 = vsel %vm446, %v862, 0
    %v958 = vsel %vm446, %v865, 0
    %960 = vmatpush.msra.mxu0 0.0
    %961 = vmatpush.msra.mxu0 0.0
    %962 = vmatpush.msra.mxu0 0.0
    %963 = vmatpush.msra.mxu0 0.0
    %964 = vmatpush.msra.mxu0 0.0
    %965 = vmatpush.msra.mxu0 0.0
    %966 = vmatpush.msra.mxu0 0.0
    %967 = vmatpush.msra.mxu0 0.0
    %968 = vmatpush.msra.mxu0 0.0
    %969 = vmatpush.msra.mxu0 0.0
    %970 = vmatpush.msra.mxu0 0.0
    %971 = vmatpush.msra.mxu0 0.0
    %972 = vmatpush.msra.mxu0 0.0
    %973 = vmatpush.msra.mxu0 0.0
    %974 = vmatpush.msra.mxu0 0.0
    %975 = vmatpush.msra.mxu0 %v106
    %976 = vmatmul.f32.gmra.mxu0 %v955
    %v977 = vpop.f32.mrf.mxu0
    %v978 = vadd.f32 0.0, %v977
    %979 = vmatmul.f32.gmra.mxu0 %v958
    %v980 = vpop.f32.mrf.mxu0
    %v981 = vadd.f32 0.0, %v980
    %982 = vdwg.mxu0
    %v984 = vsel %vm446, %v891, 0
    %v987 = vsel %vm446, %v894, 0
    %989 = vmatpush.msra.mxu0 0.0
    %990 = vmatpush.msra.mxu0 0.0
    %991 = vmatpush.msra.mxu0 0.0
    %992 = vmatpush.msra.mxu0 0.0
    %993 = vmatpush.msra.mxu0 0.0
    %994 = vmatpush.msra.mxu0 0.0
    %995 = vmatpush.msra.mxu0 0.0
    %996 = vmatpush.msra.mxu0 0.0
    %997 = vmatpush.msra.mxu0 0.0
    %998 = vmatpush.msra.mxu0 0.0
    %999 = vmatpush.msra.mxu0 0.0
    %1000 = vmatpush.msra.mxu0 0.0
    %1001 = vmatpush.msra.mxu0 0.0
    %1002 = vmatpush.msra.mxu0 0.0
    %1003 = vmatpush.msra.mxu0 0.0
    %1004 = vmatpush.msra.mxu0 %v107
    %1005 = vmatmul.f32.gmra.mxu0 %v984
    %v1006 = vpop.f32.mrf.mxu0
    %v1007 = vadd.f32 0.0, %v1006
    %1008 = vmatmul.f32.gmra.mxu0 %v987
    %v1009 = vpop.f32.mrf.mxu0
    %v1010 = vadd.f32 0.0, %v1009
    %1011 = vdwg.mxu0
    %v1012 = vsel %vm127, %v920, 0.0
    %v1013 = vsel %vm127, %v949, 0.0
    %v1014 = vadd.f32 %v1012, %v1013
    %v1015 = vsel %vm127, %v978, 0.0
    %v1016 = vadd.f32 %v1014, %v1015
    %v1017 = vsel %vm127, %v1007, 0.0
    %v1018 = vadd.f32 %v1016, %v1017
    %v1019 = vsel %vm127, %v923, 0.0
    %v1020 = vsel %vm127, %v952, 0.0
    %v1021 = vadd.f32 %v1019, %v1020
    %v1022 = vsel %vm127, %v981, 0.0
    %v1023 = vadd.f32 %v1021, %v1022
    %v1024 = vsel %vm127, %v1010, 0.0
    %v1025 = vadd.f32 %v1023, %v1024
    %v1026 = vperm.slane %v108, 0
    %v1027 = vadd.f32 %v1018, %v1026
    %v1028 = vadd.f32 %v1025, %v1026
    %v1029 = vadd.f32 %v61, %v1027
    %v1030 = vadd.f32 %v64, %v1028
    %v1031 = vsel %vm127, %v1029, 0.0
    %1032 = vadd.xlane.f32.xlu0 %v1031
    %v1033 = vpop.xlane.xlu0 %1032
    %v1034 = vsel %vm127, %v1030, 0.0
    %1035 = vadd.xlane.f32.xlu0 %v1034
    %v1036 = vpop.xlane.xlu0 %1035
    %v1037 = vrcp.pop 32.0
    %v1038 = vmul.f32 32.0, %v1037
    %v1039 = vsub.f32 1.0, %v1038
    %v1040 = vmul.f32 %v1037, %v1039
    %v1041 = vadd.f32 %v1037, %v1040
    %vm1042 = vweird.f32 %v1037
    %v1043 = vsel %vm1042, %v1037, %v1041
    %v1044 = vmul.f32 %v1033, %v1043
    %v1045 = vmul.f32 %v1036, %v1043
    %v1046 = vmul.f32 %v1029, %v1029
    %v1047 = vmul.f32 %v1030, %v1030
    %v1048 = vsel %vm127, %v1046, 0.0
    %1049 = vadd.xlane.f32.xlu0 %v1048
    %v1050 = vpop.xlane.xlu0 %1049
    %v1051 = vsel %vm127, %v1047, 0.0
    %1052 = vadd.xlane.f32.xlu0 %v1051
    %v1053 = vpop.xlane.xlu0 %1052
    %v1054 = vmul.f32 %v1050, %v1043
    %v1055 = vmul.f32 %v1053, %v1043
    %v1056 = vmul.f32 %v1044, %v1044
    %v1057 = vmul.f32 %v1045, %v1045
    %v1058 = vsub.f32 %v1054, %v1056
    %v1059 = vsub.f32 %v1055, %v1057
    %v1060 = vsub.f32 %v1029, %v1044
    %v1061 = vsub.f32 %v1030, %v1045
    %v1062 = vadd.f32 %v1058, 1e-05
    %v1063 = vadd.f32 %v1059, 1e-05
    %v1064 = vrsqrt.pop %v1062
    %v1065 = vmul.f32 %v1064, %v1062
    %v1066 = vmul.f32 %v1065, %v1064
    %v1067 = vmul.f32 0.5, %v1066
    %v1068 = vsub.f32 1.5, %v1067
    %v1069 = vmul.f32 %v1064, %v1068
    %vm1070 = vweird.f32 %v1062
    %vm1071 = vweird.f32 %v1064
    %vm1072 = vmor %vm1070, %vm1071
    %v1073 = vsel %vm1072, %v1064, %v1069
    %v1074 = vrsqrt.pop %v1063
    %v1075 = vmul.f32 %v1074, %v1063
    %v1076 = vmul.f32 %v1075, %v1074
    %v1077 = vmul.f32 0.5, %v1076
    %v1078 = vsub.f32 1.5, %v1077
    %v1079 = vmul.f32 %v1074, %v1078
    %vm1080 = vweird.f32 %v1063
    %vm1081 = vweird.f32 %v1074
    %vm1082 = vmor %vm1080, %vm1081
    %v1083 = vsel %vm1082, %v1074, %v1079
    %v1084 = vmul.f32 %v1060, %v1073
    %v1085 = vmul.f32 %v1061, %v1083
    %v1086 = vperm.slane %v109, 0
    %v1087 = vmul.f32 %v1084, %v1086
    %v1088 = vmul.f32 %v1085, %v1086
    %v1089 = vperm.slane %v110, 0
    %v1090 = vadd.f32 %v1087, %v1089
    %v1091 = vadd.f32 %v1088, %v1089
    %v1092 = vperm.slane %v117, 0
    %v1094 = vsel %vm127, %v1090, 0
    %v1097 = vsel %vm127, %v1091, 0
    %1099 = vmatpush.msra.mxu0 0.0
    %1100 = vmatpush.msra.mxu0 0.0
    %1101 = vmatpush.msra.mxu0 0.0
    %1102 = vmatpush.msra.mxu0 0.0
    %1103 = vmatpush.msra.mxu0 0.0
    %1104 = vmatpush.msra.mxu0 0.0
    %1105 = vmatpush.msra.mxu0 0.0
    %1106 = vmatpush.msra.mxu0 0.0
    %1107 = vmatpush.msra.mxu0 0.0
    %1108 = vmatpush.msra.mxu0 0.0
    %1109 = vmatpush.msra.mxu0 0.0
    %1110 = vmatpush.msra.mxu0 0.0
    %1111 = vmatpush.msra.mxu0 %v116
    %1112 = vmatpush.msra.mxu0 %v115
    %1113 = vmatpush.msra.mxu0 %v114
    %1114 = vmatpush.msra.mxu0 %v113
    %1115 = vmatmul.f32.gmra.mxu0 %v1094
    %v1116 = vpop.f32.mrf.mxu0
    %v1117 = vadd.f32 %v1092, %v1116
    %1118 = vmatmul.f32.gmra.mxu0 %v1097
    %v1119 = vpop.f32.mrf.mxu0
    %v1120 = vadd.f32 %v1092, %v1119
    %1121 = vdwg.mxu0
    %v1122 = vmax.f32 %v1117, 0.0
    %v1123 = vmax.f32 %v1120, 0.0
    %v1124 = vperm.slane %v126, 0
    %vm1125 = vcmask 523264
    %v1127 = vsel %vm1125, %v1122, 0
    %v1130 = vsel %vm1125, %v1123, 0
    %1132 = vmatpush.msra.mxu0 0.0
    %1133 = vmatpush.msra.mxu0 0.0
    %1134 = vmatpush.msra.mxu0 0.0
    %1135 = vmatpush.msra.mxu0 0.0
    %1136 = vmatpush.msra.mxu0 0.0
    %1137 = vmatpush.msra.mxu0 0.0
    %1138 = vmatpush.msra.mxu0 0.0
    %1139 = vmatpush.msra.mxu0 0.0
    %1140 = vmatpush.msra.mxu0 %v125
    %1141 = vmatpush.msra.mxu0 %v124
    %1142 = vmatpush.msra.mxu0 %v123
    %1143 = vmatpush.msra.mxu0 %v122
    %1144 = vmatpush.msra.mxu0 %v121
    %1145 = vmatpush.msra.mxu0 %v120
    %1146 = vmatpush.msra.mxu0 %v119
    %1147 = vmatpush.msra.mxu0 %v118
    %1148 = vmatmul.f32.gmra.mxu0 %v1127
    %v1149 = vpop.f32.mrf.mxu0
    %v1150 = vadd.f32 %v1124, %v1149
    %1151 = vmatmul.f32.gmra.mxu0 %v1130
    %v1152 = vpop.f32.mrf.mxu0
    %v1153 = vadd.f32 %v1124, %v1152
    %1154 = vdwg.mxu0
    %v1155 = vadd.f32 %v1090, %v1150
    %v1156 = vadd.f32 %v1091, %v1153
    %v1157 = vsel %vm127, %v1155, 0.0
    %1158 = vadd.xlane.f32.xlu0 %v1157
    %v1159 = vpop.xlane.xlu0 %1158
    %v1160 = vsel %vm127, %v1156, 0.0
    %1161 = vadd.xlane.f32.xlu0 %v1160
    %v1162 = vpop.xlane.xlu0 %1161
    %v1163 = vmul.f32 %v1159, %v1043
    %v1164 = vmul.f32 %v1162, %v1043
    %v1165 = vmul.f32 %v1155, %v1155
    %v1166 = vmul.f32 %v1156, %v1156
    %v1167 = vsel %vm127, %v1165, 0.0
    %1168 = vadd.xlane.f32.xlu0 %v1167
    %v1169 = vpop.xlane.xlu0 %1168
    %v1170 = vsel %vm127, %v1166, 0.0
    %1171 = vadd.xlane.f32.xlu0 %v1170
    %v1172 = vpop.xlane.xlu0 %1171
    %v1173 = vmul.f32 %v1169, %v1043
    %v1174 = vmul.f32 %v1172, %v1043
    %v1175 = vmul.f32 %v1163, %v1163
    %v1176 = vmul.f32 %v1164, %v1164
    %v1177 = vsub.f32 %v1173, %v1175
    %v1178 = vsub.f32 %v1174, %v1176
    %v1179 = vsub.f32 %v1155, %v1163
    %v1180 = vsub.f32 %v1156, %v1164
    %v1181 = vadd.f32 %v1177, 1e-05
    %v1182 = vadd.f32 %v1178, 1e-05
    %v1183 = vrsqrt.pop %v1181
    %v1184 = vmul.f32 %v1183, %v1181
    %v1185 = vmul.f32 %v1184, %v1183
    %v1186 = vmul.f32 0.5, %v1185
    %v1187 = vsub.f32 1.5, %v1186
    %v1188 = vmul.f32 %v1183, %v1187
    %vm1189 = vweird.f32 %v1181
    %vm1190 = vweird.f32 %v1183
    %vm1191 = vmor %vm1189, %vm1190
    %v1192 = vsel %vm1191, %v1183, %v1188
    %v1193 = vrsqrt.pop %v1182
    %v1194 = vmul.f32 %v1193, %v1182
    %v1195 = vmul.f32 %v1194, %v1193
    %v1196 = vmul.f32 0.5, %v1195
    %v1197 = vsub.f32 1.5, %v1196
    %v1198 = vmul.f32 %v1193, %v1197
    %vm1199 = vweird.f32 %v1182
    %vm1200 = vweird.f32 %v1193
    %vm1201 = vmor %vm1199, %vm1200
    %v1202 = vsel %vm1201, %v1193, %v1198
    %v1203 = vmul.f32 %v1179, %v1192
    %v1204 = vmul.f32 %v1180, %v1202
    %v1205 = vperm.slane %v111, 0
    %v1206 = vmul.f32 %v1203, %v1205
    %v1207 = vmul.f32 %v1204, %v1205
    %v1208 = vperm.slane %v112, 0
    %v1209 = vadd.f32 %v1206, %v1208
    %v1210 = vadd.f32 %v1207, %v1208
    %v1211 = vld [vmem:[#allocation2 + $0x228] sm:$0xff]
    %v1212 = vld [vmem:[#allocation2 + $0x230] sm:$0xff]
    %v1213 = vld [vmem:[#allocation2 + $0x238] sm:$0xff]
    %v1214 = vld [vmem:[#allocation2 + $0x240] sm:$0xff]
    %v1215 = vld [vmem:[#allocation2 + $0x248] sm:$0xff]
    %v1216 = vld [vmem:[#allocation2 + $0x250] sm:$0xff]
    %v1217 = vld [vmem:[#allocation2 + $0x258] sm:$0xff]
    %v1218 = vld [vmem:[#allocation2 + $0x260] sm:$0xff]
    %v1219 = vld [vmem:[#allocation2 + $0x268] sm:$0xff]
    %v1220 = vld [vmem:[#allocation2 + $0x270] sm:$0xff]
    %v1221 = vld [vmem:[#allocation2 + $0x278] sm:$0xff]
    %v1222 = vld [vmem:[#allocation2 + $0x280] sm:$0xff]
    %v1223 = vld [vmem:[#allocation2 + $0x288] sm:$0xff]
    %v1224 = vld [vmem:[#allocation2 + $0x290] sm:$0xff]
    %v1225 = vld [vmem:[#allocation2 + $0x298] sm:$0xff]
    %v1226 = vld [vmem:[#allocation2 + $0x2a0] sm:$0xff]
    %v1227 = vld [vmem:[#allocation2 + $0x2a8] sm:$0xff]
    %v1228 = vld [vmem:[#allocation2 + $0x2b0] sm:$0xff]
    %v1229 = vld [vmem:[#allocation2 + $0x2b8] sm:$0xff]
    %v1230 = vld [vmem:[#allocation2 + $0x2c0] sm:$0xff]
    %v1231 = vld [vmem:[#allocation2 + $0x2c8] sm:$0xff]
    %v1232 = vld [vmem:[#allocation2 + $0x2d0] sm:$0xff]
    %v1233 = vld [vmem:[#allocation2 + $0x2d8] sm:$0xff]
    %v1234 = vld [vmem:[#allocation2 + $0x2e0] sm:$0xff]
    %v1235 = vld [vmem:[#allocation2 + $0x2e8] sm:$0xff]
    %v1236 = vld [vmem:[#allocation2 + $0x2f0] sm:$0xff]
    %v1237 = vld [vmem:[#allocation2 + $0x2f8] sm:$0xff]
    %v1238 = vld [vmem:[#allocation2 + $0x300] sm:$0xff]
    %v1239 = vld [vmem:[#allocation2 + $0x308] sm:$0xff]
    %v1240 = vld [vmem:[#allocation2 + $0x310] sm:$0xff]
    %v1241 = vld [vmem:[#allocation2 + $0x318] sm:$0xff]
    %v1242 = vld [vmem:[#allocation2 + $0x320] sm:$0xff]
    %v1243 = vld [vmem:[#allocation2 + $0x328] sm:$0xff]
    %v1244 = vld [vmem:[#allocation2 + $0x330] sm:$0xff]
    %v1245 = vld [vmem:[#allocation2 + $0x338] sm:$0xff]
    %v1246 = vld [vmem:[#allocation2 + $0x340] sm:$0xff]
    %v1247 = vld [vmem:[#allocation2 + $0x348] sm:$0xff]
    %v1248 = vld [vmem:[#allocation2 + $0x350] sm:$0xff]
    %v1249 = vld [vmem:[#allocation2 + $0x358] sm:$0xff]
    %v1250 = vld [vmem:[#allocation2 + $0x360] sm:$0xff]
    %v1251 = vld [vmem:[#allocation2 + $0x368] sm:$0x1]
    %v1252 = vld [vmem:[#allocation2 + $0x370] sm:$0x1]
    %v1253 = vld [vmem:[#allocation2 + $0x378] sm:$0x1]
    %v1254 = vld [vmem:[#allocation2 + $0x380] sm:$0x1]
    %v1255 = vld [vmem:[#allocation2 + $0x388] sm:$0x1]
    %v1256 = vld [vmem:[#allocation2 + $0x390] sm:$0xff]
    %v1257 = vld [vmem:[#allocation2 + $0x398] sm:$0xff]
    %v1258 = vld [vmem:[#allocation2 + $0x3a0] sm:$0xff]
    %v1259 = vld [vmem:[#allocation2 + $0x3a8] sm:$0xff]
    %v1260 = vld [vmem:[#allocation2 + $0x3b0] sm:$0x1]
    %v1261 = vld [vmem:[#allocation2 + $0x3b8] sm:$0xff]
    %v1262 = vld [vmem:[#allocation2 + $0x3c0] sm:$0xff]
    %v1263 = vld [vmem:[#allocation2 + $0x3c8] sm:$0xff]
    %v1264 = vld [vmem:[#allocation2 + $0x3d0] sm:$0xff]
    %v1265 = vld [vmem:[#allocation2 + $0x3d8] sm:$0xff]
    %v1266 = vld [vmem:[#allocation2 + $0x3e0] sm:$0xff]
    %v1267 = vld [vmem:[#allocation2 + $0x3e8] sm:$0xff]
    %v1268 = vld [vmem:[#allocation2 + $0x3f0] sm:$0xff]
    %v1269 = vld [vmem:[#allocation2 + $0x3f8] sm:$0x1]
    %v1271 = vsel %vm127, %v1209, 0
    %v1274 = vsel %vm127, %v1210, 0
    %v1277 = vsel %vm127, %v1211, 0
    %1279 = vmatpush.xpose.msra.mxu0 0.0
    %1280 = vmatpush.xpose.msra.mxu0 0.0
    %1281 = vmatpush.xpose.msra.mxu0 0.0
    %1282 = vmatpush.xpose.msra.mxu0 0.0
    %1283 = vmatpush.xpose.msra.mxu0 0.0
    %1284 = vmatpush.xpose.msra.mxu0 0.0
    %1285 = vmatpush.xpose.msra.mxu0 0.0
    %1286 = vmatpush.xpose.msra.mxu0 0.0
    %1287 = vmatpush.xpose.msra.mxu0 0.0
    %1288 = vmatpush.xpose.msra.mxu0 0.0
    %1289 = vmatpush.xpose.msra.mxu0 0.0
    %1290 = vmatpush.xpose.msra.mxu0 0.0
    %1291 = vmatpush.xpose.msra.mxu0 0.0
    %1292 = vmatpush.xpose.msra.mxu0 0.0
    %1293 = vmatpush.xpose.msra.mxu0 0.0
    %1294 = vmatpush.xpose.msra.mxu0 %v1277
    %1295 = vmatmul.f32.gmra.mxu0 %v1271
    %v1296 = vpop.f32.mrf.mxu0
    %v1297 = vadd.f32 %v1223, %v1296
    %1298 = vmatmul.f32.gmra.mxu0 %v1274
    %v1299 = vpop.f32.mrf.mxu0
    %v1300 = vadd.f32 %v1224, %v1299
    %1301 = vdwg.mxu0
    %v1303 = vsel %vm127, %v1212, 0
    %1305 = vmatpush.xpose.msra.mxu0 0.0
    %1306 = vmatpush.xpose.msra.mxu0 0.0
    %1307 = vmatpush.xpose.msra.mxu0 0.0
    %1308 = vmatpush.xpose.msra.mxu0 0.0
    %1309 = vmatpush.xpose.msra.mxu0 0.0
    %1310 = vmatpush.xpose.msra.mxu0 0.0
    %1311 = vmatpush.xpose.msra.mxu0 0.0
    %1312 = vmatpush.xpose.msra.mxu0 0.0
    %1313 = vmatpush.xpose.msra.mxu0 0.0
    %1314 = vmatpush.xpose.msra.mxu0 0.0
    %1315 = vmatpush.xpose.msra.mxu0 0.0
    %1316 = vmatpush.xpose.msra.mxu0 0.0
    %1317 = vmatpush.xpose.msra.mxu0 0.0
    %1318 = vmatpush.xpose.msra.mxu0 0.0
    %1319 = vmatpush.xpose.msra.mxu0 0.0
    %1320 = vmatpush.xpose.msra.mxu0 %v1303
    %1321 = vmatmul.f32.gmra.mxu0 %v1271
    %v1322 = vpop.f32.mrf.mxu0
    %v1323 = vadd.f32 %v1225, %v1322
    %1324 = vmatmul.f32.gmra.mxu0 %v1274
    %v1325 = vpop.f32.mrf.mxu0
    %v1326 = vadd.f32 %v1226, %v1325
    %1327 = vdwg.mxu0
    %v1329 = vsel %vm127, %v1213, 0
    %1331 = vmatpush.xpose.msra.mxu0 0.0
    %1332 = vmatpush.xpose.msra.mxu0 0.0
    %1333 = vmatpush.xpose.msra.mxu0 0.0
    %1334 = vmatpush.xpose.msra.mxu0 0.0
    %1335 = vmatpush.xpose.msra.mxu0 0.0
    %1336 = vmatpush.xpose.msra.mxu0 0.0
    %1337 = vmatpush.xpose.msra.mxu0 0.0
    %1338 = vmatpush.xpose.msra.mxu0 0.0
    %1339 = vmatpush.xpose.msra.mxu0 0.0
    %1340 = vmatpush.xpose.msra.mxu0 0.0
    %1341 = vmatpush.xpose.msra.mxu0 0.0
    %1342 = vmatpush.xpose.msra.mxu0 0.0
    %1343 = vmatpush.xpose.msra.mxu0 0.0
    %1344 = vmatpush.xpose.msra.mxu0 0.0
    %1345 = vmatpush.xpose.msra.mxu0 0.0
    %1346 = vmatpush.xpose.msra.mxu0 %v1329
    %1347 = vmatmul.f32.gmra.mxu0 %v1271
    %v1348 = vpop.f32.mrf.mxu0
    %v1349 = vadd.f32 %v1227, %v1348
    %1350 = vmatmul.f32.gmra.mxu0 %v1274
    %v1351 = vpop.f32.mrf.mxu0
    %v1352 = vadd.f32 %v1228, %v1351
    %1353 = vdwg.mxu0
    %v1355 = vsel %vm127, %v1214, 0
    %1357 = vmatpush.xpose.msra.mxu0 0.0
    %1358 = vmatpush.xpose.msra.mxu0 0.0
    %1359 = vmatpush.xpose.msra.mxu0 0.0
    %1360 = vmatpush.xpose.msra.mxu0 0.0
    %1361 = vmatpush.xpose.msra.mxu0 0.0
    %1362 = vmatpush.xpose.msra.mxu0 0.0
    %1363 = vmatpush.xpose.msra.mxu0 0.0
    %1364 = vmatpush.xpose.msra.mxu0 0.0
    %1365 = vmatpush.xpose.msra.mxu0 0.0
    %1366 = vmatpush.xpose.msra.mxu0 0.0
    %1367 = vmatpush.xpose.msra.mxu0 0.0
    %1368 = vmatpush.xpose.msra.mxu0 0.0
    %1369 = vmatpush.xpose.msra.mxu0 0.0
    %1370 = vmatpush.xpose.msra.mxu0 0.0
    %1371 = vmatpush.xpose.msra.mxu0 0.0
    %1372 = vmatpush.xpose.msra.mxu0 %v1355
    %1373 = vmatmul.f32.gmra.mxu0 %v1271
    %v1374 = vpop.f32.mrf.mxu0
    %v1375 = vadd.f32 %v1229, %v1374
    %1376 = vmatmul.f32.gmra.mxu0 %v1274
    %v1377 = vpop.f32.mrf.mxu0
    %v1378 = vadd.f32 %v1230, %v1377
    %1379 = vdwg.mxu0
    %v1381 = vsel %vm127, %v1215, 0
    %1383 = vmatpush.xpose.msra.mxu0 0.0
    %1384 = vmatpush.xpose.msra.mxu0 0.0
    %1385 = vmatpush.xpose.msra.mxu0 0.0
    %1386 = vmatpush.xpose.msra.mxu0 0.0
    %1387 = vmatpush.xpose.msra.mxu0 0.0
    %1388 = vmatpush.xpose.msra.mxu0 0.0
    %1389 = vmatpush.xpose.msra.mxu0 0.0
    %1390 = vmatpush.xpose.msra.mxu0 0.0
    %1391 = vmatpush.xpose.msra.mxu0 0.0
    %1392 = vmatpush.xpose.msra.mxu0 0.0
    %1393 = vmatpush.xpose.msra.mxu0 0.0
    %1394 = vmatpush.xpose.msra.mxu0 0.0
    %1395 = vmatpush.xpose.msra.mxu0 0.0
    %1396 = vmatpush.xpose.msra.mxu0 0.0
    %1397 = vmatpush.xpose.msra.mxu0 0.0
    %1398 = vmatpush.xpose.msra.mxu0 %v1381
    %1399 = vmatmul.f32.gmra.mxu0 %v1271
    %v1400 = vpop.f32.mrf.mxu0
    %v1401 = vadd.f32 %v1231, %v1400
    %1402 = vmatmul.f32.gmra.mxu0 %v1274
    %v1403 = vpop.f32.mrf.mxu0
    %v1404 = vadd.f32 %v1232, %v1403
    %1405 = vdwg.mxu0
    %v1407 = vsel %vm127, %v1216, 0
    %1409 = vmatpush.xpose.msra.mxu0 0.0
    %1410 = vmatpush.xpose.msra.mxu0 0.0
    %1411 = vmatpush.xpose.msra.mxu0 0.0
    %1412 = vmatpush.xpose.msra.mxu0 0.0
    %1413 = vmatpush.xpose.msra.mxu0 0.0
    %1414 = vmatpush.xpose.msra.mxu0 0.0
    %1415 = vmatpush.xpose.msra.mxu0 0.0
    %1416 = vmatpush.xpose.msra.mxu0 0.0
    %1417 = vmatpush.xpose.msra.mxu0 0.0
    %1418 = vmatpush.xpose.msra.mxu0 0.0
    %1419 = vmatpush.xpose.msra.mxu0 0.0
    %1420 = vmatpush.xpose.msra.mxu0 0.0
    %1421 = vmatpush.xpose.msra.mxu0 0.0
    %1422 = vmatpush.xpose.msra.mxu0 0.0
    %1423 = vmatpush.xpose.msra.mxu0 0.0
    %1424 = vmatpush.xpose.msra.mxu0 %v1407
    %1425 = vmatmul.f32.gmra.mxu0 %v1271
    %v1426 = vpop.f32.mrf.mxu0
    %v1427 = vadd.f32 %v1233, %v1426
    %1428 = vmatmul.f32.gmra.mxu0 %v1274
    %v1429 = vpop.f32.mrf.mxu0
    %v1430 = vadd.f32 %v1234, %v1429
    %1431 = vdwg.mxu0
    %v1433 = vsel %vm127, %v1217, 0
    %1435 = vmatpush.xpose.msra.mxu0 0.0
    %1436 = vmatpush.xpose.msra.mxu0 0.0
    %1437 = vmatpush.xpose.msra.mxu0 0.0
    %1438 = vmatpush.xpose.msra.mxu0 0.0
    %1439 = vmatpush.xpose.msra.mxu0 0.0
    %1440 = vmatpush.xpose.msra.mxu0 0.0
    %1441 = vmatpush.xpose.msra.mxu0 0.0
    %1442 = vmatpush.xpose.msra.mxu0 0.0
    %1443 = vmatpush.xpose.msra.mxu0 0.0
    %1444 = vmatpush.xpose.msra.mxu0 0.0
    %1445 = vmatpush.xpose.msra.mxu0 0.0
    %1446 = vmatpush.xpose.msra.mxu0 0.0
    %1447 = vmatpush.xpose.msra.mxu0 0.0
    %1448 = vmatpush.xpose.msra.mxu0 0.0
    %1449 = vmatpush.xpose.msra.mxu0 0.0
    %1450 = vmatpush.xpose.msra.mxu0 %v1433
    %1451 = vmatmul.f32.gmra.mxu0 %v1271
    %v1452 = vpop.f32.mrf.mxu0
    %v1453 = vadd.f32 %v1235, %v1452
    %1454 = vmatmul.f32.gmra.mxu0 %v1274
    %v1455 = vpop.f32.mrf.mxu0
    %v1456 = vadd.f32 %v1236, %v1455
    %1457 = vdwg.mxu0
    %v1459 = vsel %vm127, %v1218, 0
    %1461 = vmatpush.xpose.msra.mxu0 0.0
    %1462 = vmatpush.xpose.msra.mxu0 0.0
    %1463 = vmatpush.xpose.msra.mxu0 0.0
    %1464 = vmatpush.xpose.msra.mxu0 0.0
    %1465 = vmatpush.xpose.msra.mxu0 0.0
    %1466 = vmatpush.xpose.msra.mxu0 0.0
    %1467 = vmatpush.xpose.msra.mxu0 0.0
    %1468 = vmatpush.xpose.msra.mxu0 0.0
    %1469 = vmatpush.xpose.msra.mxu0 0.0
    %1470 = vmatpush.xpose.msra.mxu0 0.0
    %1471 = vmatpush.xpose.msra.mxu0 0.0
    %1472 = vmatpush.xpose.msra.mxu0 0.0
    %1473 = vmatpush.xpose.msra.mxu0 0.0
    %1474 = vmatpush.xpose.msra.mxu0 0.0
    %1475 = vmatpush.xpose.msra.mxu0 0.0
    %1476 = vmatpush.xpose.msra.mxu0 %v1459
    %1477 = vmatmul.f32.gmra.mxu0 %v1271
    %v1478 = vpop.f32.mrf.mxu0
    %v1479 = vadd.f32 %v1237, %v1478
    %1480 = vmatmul.f32.gmra.mxu0 %v1274
    %v1481 = vpop.f32.mrf.mxu0
    %v1482 = vadd.f32 %v1238, %v1481
    %1483 = vdwg.mxu0
    %v1485 = vsel %vm127, %v1219, 0
    %1487 = vmatpush.xpose.msra.mxu0 0.0
    %1488 = vmatpush.xpose.msra.mxu0 0.0
    %1489 = vmatpush.xpose.msra.mxu0 0.0
    %1490 = vmatpush.xpose.msra.mxu0 0.0
    %1491 = vmatpush.xpose.msra.mxu0 0.0
    %1492 = vmatpush.xpose.msra.mxu0 0.0
    %1493 = vmatpush.xpose.msra.mxu0 0.0
    %1494 = vmatpush.xpose.msra.mxu0 0.0
    %1495 = vmatpush.xpose.msra.mxu0 0.0
    %1496 = vmatpush.xpose.msra.mxu0 0.0
    %1497 = vmatpush.xpose.msra.mxu0 0.0
    %1498 = vmatpush.xpose.msra.mxu0 0.0
    %1499 = vmatpush.xpose.msra.mxu0 0.0
    %1500 = vmatpush.xpose.msra.mxu0 0.0
    %1501 = vmatpush.xpose.msra.mxu0 0.0
    %1502 = vmatpush.xpose.msra.mxu0 %v1485
    %1503 = vmatmul.f32.gmra.mxu0 %v1271
    %v1504 = vpop.f32.mrf.mxu0
    %v1505 = vadd.f32 %v1239, %v1504
    %1506 = vmatmul.f32.gmra.mxu0 %v1274
    %v1507 = vpop.f32.mrf.mxu0
    %v1508 = vadd.f32 %v1240, %v1507
    %1509 = vdwg.mxu0
    %v1511 = vsel %vm127, %v1220, 0
    %1513 = vmatpush.xpose.msra.mxu0 0.0
    %1514 = vmatpush.xpose.msra.mxu0 0.0
    %1515 = vmatpush.xpose.msra.mxu0 0.0
    %1516 = vmatpush.xpose.msra.mxu0 0.0
    %1517 = vmatpush.xpose.msra.mxu0 0.0
    %1518 = vmatpush.xpose.msra.mxu0 0.0
    %1519 = vmatpush.xpose.msra.mxu0 0.0
    %1520 = vmatpush.xpose.msra.mxu0 0.0
    %1521 = vmatpush.xpose.msra.mxu0 0.0
    %1522 = vmatpush.xpose.msra.mxu0 0.0
    %1523 = vmatpush.xpose.msra.mxu0 0.0
    %1524 = vmatpush.xpose.msra.mxu0 0.0
    %1525 = vmatpush.xpose.msra.mxu0 0.0
    %1526 = vmatpush.xpose.msra.mxu0 0.0
    %1527 = vmatpush.xpose.msra.mxu0 0.0
    %1528 = vmatpush.xpose.msra.mxu0 %v1511
    %1529 = vmatmul.f32.gmra.mxu0 %v1271
    %v1530 = vpop.f32.mrf.mxu0
    %v1531 = vadd.f32 %v1241, %v1530
    %1532 = vmatmul.f32.gmra.mxu0 %v1274
    %v1533 = vpop.f32.mrf.mxu0
    %v1534 = vadd.f32 %v1242, %v1533
    %1535 = vdwg.mxu0
    %v1537 = vsel %vm127, %v1221, 0
    %1539 = vmatpush.xpose.msra.mxu0 0.0
    %1540 = vmatpush.xpose.msra.mxu0 0.0
    %1541 = vmatpush.xpose.msra.mxu0 0.0
    %1542 = vmatpush.xpose.msra.mxu0 0.0
    %1543 = vmatpush.xpose.msra.mxu0 0.0
    %1544 = vmatpush.xpose.msra.mxu0 0.0
    %1545 = vmatpush.xpose.msra.mxu0 0.0
    %1546 = vmatpush.xpose.msra.mxu0 0.0
    %1547 = vmatpush.xpose.msra.mxu0 0.0
    %1548 = vmatpush.xpose.msra.mxu0 0.0
    %1549 = vmatpush.xpose.msra.mxu0 0.0
    %1550 = vmatpush.xpose.msra.mxu0 0.0
    %1551 = vmatpush.xpose.msra.mxu0 0.0
    %1552 = vmatpush.xpose.msra.mxu0 0.0
    %1553 = vmatpush.xpose.msra.mxu0 0.0
    %1554 = vmatpush.xpose.msra.mxu0 %v1537
    %1555 = vmatmul.f32.gmra.mxu0 %v1271
    %v1556 = vpop.f32.mrf.mxu0
    %v1557 = vadd.f32 %v1243, %v1556
    %1558 = vmatmul.f32.gmra.mxu0 %v1274
    %v1559 = vpop.f32.mrf.mxu0
    %v1560 = vadd.f32 %v1244, %v1559
    %1561 = vdwg.mxu0
    %v1563 = vsel %vm127, %v1222, 0
    %1565 = vmatpush.xpose.msra.mxu0 0.0
    %1566 = vmatpush.xpose.msra.mxu0 0.0
    %1567 = vmatpush.xpose.msra.mxu0 0.0
    %1568 = vmatpush.xpose.msra.mxu0 0.0
    %1569 = vmatpush.xpose.msra.mxu0 0.0
    %1570 = vmatpush.xpose.msra.mxu0 0.0
    %1571 = vmatpush.xpose.msra.mxu0 0.0
    %1572 = vmatpush.xpose.msra.mxu0 0.0
    %1573 = vmatpush.xpose.msra.mxu0 0.0
    %1574 = vmatpush.xpose.msra.mxu0 0.0
    %1575 = vmatpush.xpose.msra.mxu0 0.0
    %1576 = vmatpush.xpose.msra.mxu0 0.0
    %1577 = vmatpush.xpose.msra.mxu0 0.0
    %1578 = vmatpush.xpose.msra.mxu0 0.0
    %1579 = vmatpush.xpose.msra.mxu0 0.0
    %1580 = vmatpush.xpose.msra.mxu0 %v1563
    %1581 = vmatmul.f32.gmra.mxu0 %v1271
    %v1582 = vpop.f32.mrf.mxu0
    %v1583 = vadd.f32 %v1245, %v1582
    %1584 = vmatmul.f32.gmra.mxu0 %v1274
    %v1585 = vpop.f32.mrf.mxu0
    %v1586 = vadd.f32 %v1246, %v1585
    %1587 = vdwg.mxu0
    %v1589 = vsel %vm446, %v1297, 0
    %v1592 = vsel %vm446, %v1300, 0
    %v1595 = vsel %vm446, %v1401, 0
    %v1598 = vsel %vm446, %v1404, 0
    %1600 = vmatpush.xpose.msra.mxu0 0.0
    %1601 = vmatpush.xpose.msra.mxu0 0.0
    %1602 = vmatpush.xpose.msra.mxu0 0.0
    %1603 = vmatpush.xpose.msra.mxu0 0.0
    %1604 = vmatpush.xpose.msra.mxu0 0.0
    %1605 = vmatpush.xpose.msra.mxu0 0.0
    %1606 = vmatpush.xpose.msra.mxu0 0.0
    %1607 = vmatpush.xpose.msra.mxu0 0.0
    %1608 = vmatpush.xpose.msra.mxu0 0.0
    %1609 = vmatpush.xpose.msra.mxu0 0.0
    %1610 = vmatpush.xpose.msra.mxu0 0.0
    %1611 = vmatpush.xpose.msra.mxu0 0.0
    %1612 = vmatpush.xpose.msra.mxu0 0.0
    %1613 = vmatpush.xpose.msra.mxu0 0.0
    %1614 = vmatpush.xpose.msra.mxu0 %v1598
    %1615 = vmatpush.xpose.msra.mxu0 %v1595
    %1616 = vmatmul.f32.gmra.mxu0 %v1589
    %v1617 = vpop.f32.mrf.mxu0
    %v1618 = vadd.f32 %v66, %v1617
    %1619 = vmatmul.f32.gmra.mxu0 %v1592
    %v1620 = vpop.f32.mrf.mxu0
    %v1621 = vadd.f32 %v67, %v1620
    %1622 = vdwg.mxu0
    %v1624 = vsel %vm446, %v1323, 0
    %v1627 = vsel %vm446, %v1326, 0
    %v1630 = vsel %vm446, %v1427, 0
    %v1633 = vsel %vm446, %v1430, 0
    %1635 = vmatpush.xpose.msra.mxu0 0.0
    %1636 = vmatpush.xpose.msra.mxu0 0.0
    %1637 = vmatpush.xpose.msra.mxu0 0.0
    %1638 = vmatpush.xpose.msra.mxu0 0.0
    %1639 = vmatpush.xpose.msra.mxu0 0.0
    %1640 = vmatpush.xpose.msra.mxu0 0.0
    %1641 = vmatpush.xpose.msra.mxu0 0.0
    %1642 = vmatpush.xpose.msra.mxu0 0.0
    %1643 = vmatpush.xpose.msra.mxu0 0.0
    %1644 = vmatpush.xpose.msra.mxu0 0.0
    %1645 = vmatpush.xpose.msra.mxu0 0.0
    %1646 = vmatpush.xpose.msra.mxu0 0.0
    %1647 = vmatpush.xpose.msra.mxu0 0.0
    %1648 = vmatpush.xpose.msra.mxu0 0.0
    %1649 = vmatpush.xpose.msra.mxu0 %v1633
    %1650 = vmatpush.xpose.msra.mxu0 %v1630
    %1651 = vmatmul.f32.gmra.mxu0 %v1624
    %v1652 = vpop.f32.mrf.mxu0
    %v1653 = vadd.f32 %v66, %v1652
    %1654 = vmatmul.f32.gmra.mxu0 %v1627
    %v1655 = vpop.f32.mrf.mxu0
    %v1656 = vadd.f32 %v67, %v1655
    %1657 = vdwg.mxu0
    %v1659 = vsel %vm446, %v1349, 0
    %v1662 = vsel %vm446, %v1352, 0
    %v1665 = vsel %vm446, %v1453, 0
    %v1668 = vsel %vm446, %v1456, 0
    %1670 = vmatpush.xpose.msra.mxu0 0.0
    %1671 = vmatpush.xpose.msra.mxu0 0.0
    %1672 = vmatpush.xpose.msra.mxu0 0.0
    %1673 = vmatpush.xpose.msra.mxu0 0.0
    %1674 = vmatpush.xpose.msra.mxu0 0.0
    %1675 = vmatpush.xpose.msra.mxu0 0.0
    %1676 = vmatpush.xpose.msra.mxu0 0.0
    %1677 = vmatpush.xpose.msra.mxu0 0.0
    %1678 = vmatpush.xpose.msra.mxu0 0.0
    %1679 = vmatpush.xpose.msra.mxu0 0.0
    %1680 = vmatpush.xpose.msra.mxu0 0.0
    %1681 = vmatpush.xpose.msra.mxu0 0.0
    %1682 = vmatpush.xpose.msra.mxu0 0.0
    %1683 = vmatpush.xpose.msra.mxu0 0.0
    %1684 = vmatpush.xpose.msra.mxu0 %v1668
    %1685 = vmatpush.xpose.msra.mxu0 %v1665
    %1686 = vmatmul.f32.gmra.mxu0 %v1659
    %v1687 = vpop.f32.mrf.mxu0
    %v1688 = vadd.f32 %v66, %v1687
    %1689 = vmatmul.f32.gmra.mxu0 %v1662
    %v1690 = vpop.f32.mrf.mxu0
    %v1691 = vadd.f32 %v67, %v1690
    %1692 = vdwg.mxu0
    %v1694 = vsel %vm446, %v1375, 0
    %v1697 = vsel %vm446, %v1378, 0
    %v1700 = vsel %vm446, %v1479, 0
    %v1703 = vsel %vm446, %v1482, 0
    %1705 = vmatpush.xpose.msra.mxu0 0.0
    %1706 = vmatpush.xpose.msra.mxu0 0.0
    %1707 = vmatpush.xpose.msra.mxu0 0.0
    %1708 = vmatpush.xpose.msra.mxu0 0.0
    %1709 = vmatpush.xpose.msra.mxu0 0.0
    %1710 = vmatpush.xpose.msra.mxu0 0.0
    %1711 = vmatpush.xpose.msra.mxu0 0.0
    %1712 = vmatpush.xpose.msra.mxu0 0.0
    %1713 = vmatpush.xpose.msra.mxu0 0.0
    %1714 = vmatpush.xpose.msra.mxu0 0.0
    %1715 = vmatpush.xpose.msra.mxu0 0.0
    %1716 = vmatpush.xpose.msra.mxu0 0.0
    %1717 = vmatpush.xpose.msra.mxu0 0.0
    %1718 = vmatpush.xpose.msra.mxu0 0.0
    %1719 = vmatpush.xpose.msra.mxu0 %v1703
    %1720 = vmatpush.xpose.msra.mxu0 %v1700
    %1721 = vmatmul.f32.gmra.mxu0 %v1694
    %v1722 = vpop.f32.mrf.mxu0
    %v1723 = vadd.f32 %v66, %v1722
    %1724 = vmatmul.f32.gmra.mxu0 %v1697
    %v1725 = vpop.f32.mrf.mxu0
    %v1726 = vadd.f32 %v67, %v1725
    %1727 = vdwg.mxu0
    %v1728 = vsel %vm587, %v1618, -inf
    %1729 = vmax.xlane.f32.xlu0 %v1728
    %v1730 = vpop.xlane.xlu0 %1729
    %v1731 = vsel %vm587, %v1621, -inf
    %1732 = vmax.xlane.f32.xlu0 %v1731
    %v1733 = vpop.xlane.xlu0 %1732
    %v1734 = vsel %vm587, %v1653, -inf
    %1735 = vmax.xlane.f32.xlu0 %v1734
    %v1736 = vpop.xlane.xlu0 %1735
    %v1737 = vsel %vm587, %v1656, -inf
    %1738 = vmax.xlane.f32.xlu0 %v1737
    %v1739 = vpop.xlane.xlu0 %1738
    %v1740 = vsel %vm587, %v1688, -inf
    %1741 = vmax.xlane.f32.xlu0 %v1740
    %v1742 = vpop.xlane.xlu0 %1741
    %v1743 = vsel %vm587, %v1691, -inf
    %1744 = vmax.xlane.f32.xlu0 %v1743
    %v1745 = vpop.xlane.xlu0 %1744
    %v1746 = vsel %vm587, %v1723, -inf
    %1747 = vmax.xlane.f32.xlu0 %v1746
    %v1748 = vpop.xlane.xlu0 %1747
    %v1749 = vsel %vm587, %v1726, -inf
    %1750 = vmax.xlane.f32.xlu0 %v1749
    %v1751 = vpop.xlane.xlu0 %1750
    %v1752 = vsub.f32 %v1618, %v1730
    %v1753 = vsub.f32 %v1621, %v1733
    %v1754 = vsub.f32 %v1653, %v1736
    %v1755 = vsub.f32 %v1656, %v1739
    %v1756 = vsub.f32 %v1688, %v1742
    %v1757 = vsub.f32 %v1691, %v1745
    %v1758 = vsub.f32 %v1723, %v1748
    %v1759 = vsub.f32 %v1726, %v1751
    %v1760 = vmul.f32 %v1752, 1.442695
    %v1761 = vpow.pop %v1760
    %v1762 = vmul.f32 %v1753, 1.442695
    %v1763 = vpow.pop %v1762
    %v1764 = vmul.f32 %v1754, 1.442695
    %v1765 = vpow.pop %v1764
    %v1766 = vmul.f32 %v1755, 1.442695
    %v1767 = vpow.pop %v1766
    %v1768 = vmul.f32 %v1756, 1.442695
    %v1769 = vpow.pop %v1768
    %v1770 = vmul.f32 %v1757, 1.442695
    %v1771 = vpow.pop %v1770
    %v1772 = vmul.f32 %v1758, 1.442695
    %v1773 = vpow.pop %v1772
    %v1774 = vmul.f32 %v1759, 1.442695
    %v1775 = vpow.pop %v1774
    %v1776 = vsel %vm587, %v1761, 0.0
    %1777 = vadd.xlane.f32.xlu0 %v1776
    %v1778 = vpop.xlane.xlu0 %1777
    %v1779 = vsel %vm587, %v1763, 0.0
    %1780 = vadd.xlane.f32.xlu0 %v1779
    %v1781 = vpop.xlane.xlu0 %1780
    %v1782 = vsel %vm587, %v1765, 0.0
    %1783 = vadd.xlane.f32.xlu0 %v1782
    %v1784 = vpop.xlane.xlu0 %1783
    %v1785 = vsel %vm587, %v1767, 0.0
    %1786 = vadd.xlane.f32.xlu0 %v1785
    %v1787 = vpop.xlane.xlu0 %1786
    %v1788 = vsel %vm587, %v1769, 0.0
    %1789 = vadd.xlane.f32.xlu0 %v1788
    %v1790 = vpop.xlane.xlu0 %1789
    %v1791 = vsel %vm587, %v1771, 0.0
    %1792 = vadd.xlane.f32.xlu0 %v1791
    %v1793 = vpop.xlane.xlu0 %1792
    %v1794 = vsel %vm587, %v1773, 0.0
    %1795 = vadd.xlane.f32.xlu0 %v1794
    %v1796 = vpop.xlane.xlu0 %1795
    %v1797 = vsel %vm587, %v1775, 0.0
    %1798 = vadd.xlane.f32.xlu0 %v1797
    %v1799 = vpop.xlane.xlu0 %1798
    %v1800 = vrcp.pop %v1778
    %v1801 = vmul.f32 %v1778, %v1800
    %v1802 = vsub.f32 1.0, %v1801
    %v1803 = vmul.f32 %v1800, %v1802
    %v1804 = vadd.f32 %v1800, %v1803
    %vm1805 = vweird.f32 %v1778
    %vm1806 = vweird.f32 %v1800
    %vm1807 = vmor %vm1805, %vm1806
    %v1808 = vsel %vm1807, %v1800, %v1804
    %v1809 = vand.u32 2147483647, %v1778
    %vm1810 = vcmp.eq.f32.partialorder %v1809, 8.507059e+37
    %v1811 = vand.u32 %v1778, 2147483648
    %v1812 = vor.u32 1.1754944e-38, %v1811
    %v1813 = vsel %vm1810, %v1812, %v1808
    %v1814 = vmul.f32 %v1761, %v1813
    %v1815 = vrcp.pop %v1781
    %v1816 = vmul.f32 %v1781, %v1815
    %v1817 = vsub.f32 1.0, %v1816
    %v1818 = vmul.f32 %v1815, %v1817
    %v1819 = vadd.f32 %v1815, %v1818
    %vm1820 = vweird.f32 %v1781
    %vm1821 = vweird.f32 %v1815
    %vm1822 = vmor %vm1820, %vm1821
    %v1823 = vsel %vm1822, %v1815, %v1819
    %v1824 = vand.u32 2147483647, %v1781
    %vm1825 = vcmp.eq.f32.partialorder %v1824, 8.507059e+37
    %v1826 = vand.u32 %v1781, 2147483648
    %v1827 = vor.u32 1.1754944e-38, %v1826
    %v1828 = vsel %vm1825, %v1827, %v1823
    %v1829 = vmul.f32 %v1763, %v1828
    %v1830 = vrcp.pop %v1784
    %v1831 = vmul.f32 %v1784, %v1830
    %v1832 = vsub.f32 1.0, %v1831
    %v1833 = vmul.f32 %v1830, %v1832
    %v1834 = vadd.f32 %v1830, %v1833
    %vm1835 = vweird.f32 %v1784
    %vm1836 = vweird.f32 %v1830
    %vm1837 = vmor %vm1835, %vm1836
    %v1838 = vsel %vm1837, %v1830, %v1834
    %v1839 = vand.u32 2147483647, %v1784
    %vm1840 = vcmp.eq.f32.partialorder %v1839, 8.507059e+37
    %v1841 = vand.u32 %v1784, 2147483648
    %v1842 = vor.u32 1.1754944e-38, %v1841
    %v1843 = vsel %vm1840, %v1842, %v1838
    %v1844 = vmul.f32 %v1765, %v1843
    %v1845 = vrcp.pop %v1787
    %v1846 = vmul.f32 %v1787, %v1845
    %v1847 = vsub.f32 1.0, %v1846
    %v1848 = vmul.f32 %v1845, %v1847
    %v1849 = vadd.f32 %v1845, %v1848
    %vm1850 = vweird.f32 %v1787
    %vm1851 = vweird.f32 %v1845
    %vm1852 = vmor %vm1850, %vm1851
    %v1853 = vsel %vm1852, %v1845, %v1849
    %v1854 = vand.u32 2147483647, %v1787
    %vm1855 = vcmp.eq.f32.partialorder %v1854, 8.507059e+37
    %v1856 = vand.u32 %v1787, 2147483648
    %v1857 = vor.u32 1.1754944e-38, %v1856
    %v1858 = vsel %vm1855, %v1857, %v1853
    %v1859 = vmul.f32 %v1767, %v1858
    %v1860 = vrcp.pop %v1790
    %v1861 = vmul.f32 %v1790, %v1860
    %v1862 = vsub.f32 1.0, %v1861
    %v1863 = vmul.f32 %v1860, %v1862
    %v1864 = vadd.f32 %v1860, %v1863
    %vm1865 = vweird.f32 %v1790
    %vm1866 = vweird.f32 %v1860
    %vm1867 = vmor %vm1865, %vm1866
    %v1868 = vsel %vm1867, %v1860, %v1864
    %v1869 = vand.u32 2147483647, %v1790
    %vm1870 = vcmp.eq.f32.partialorder %v1869, 8.507059e+37
    %v1871 = vand.u32 %v1790, 2147483648
    %v1872 = vor.u32 1.1754944e-38, %v1871
    %v1873 = vsel %vm1870, %v1872, %v1868
    %v1874 = vmul.f32 %v1769, %v1873
    %v1875 = vrcp.pop %v1793
    %v1876 = vmul.f32 %v1793, %v1875
    %v1877 = vsub.f32 1.0, %v1876
    %v1878 = vmul.f32 %v1875, %v1877
    %v1879 = vadd.f32 %v1875, %v1878
    %vm1880 = vweird.f32 %v1793
    %vm1881 = vweird.f32 %v1875
    %vm1882 = vmor %vm1880, %vm1881
    %v1883 = vsel %vm1882, %v1875, %v1879
    %v1884 = vand.u32 2147483647, %v1793
    %vm1885 = vcmp.eq.f32.partialorder %v1884, 8.507059e+37
    %v1886 = vand.u32 %v1793, 2147483648
    %v1887 = vor.u32 1.1754944e-38, %v1886
    %v1888 = vsel %vm1885, %v1887, %v1883
    %v1889 = vmul.f32 %v1771, %v1888
    %v1890 = vrcp.pop %v1796
    %v1891 = vmul.f32 %v1796, %v1890
    %v1892 = vsub.f32 1.0, %v1891
    %v1893 = vmul.f32 %v1890, %v1892
    %v1894 = vadd.f32 %v1890, %v1893
    %vm1895 = vweird.f32 %v1796
    %vm1896 = vweird.f32 %v1890
    %vm1897 = vmor %vm1895, %vm1896
    %v1898 = vsel %vm1897, %v1890, %v1894
    %v1899 = vand.u32 2147483647, %v1796
    %vm1900 = vcmp.eq.f32.partialorder %v1899, 8.507059e+37
    %v1901 = vand.u32 %v1796, 2147483648
    %v1902 = vor.u32 1.1754944e-38, %v1901
    %v1903 = vsel %vm1900, %v1902, %v1898
    %v1904 = vmul.f32 %v1773, %v1903
    %v1905 = vrcp.pop %v1799
    %v1906 = vmul.f32 %v1799, %v1905
    %v1907 = vsub.f32 1.0, %v1906
    %v1908 = vmul.f32 %v1905, %v1907
    %v1909 = vadd.f32 %v1905, %v1908
    %vm1910 = vweird.f32 %v1799
    %vm1911 = vweird.f32 %v1905
    %vm1912 = vmor %vm1910, %vm1911
    %v1913 = vsel %vm1912, %v1905, %v1909
    %v1914 = vand.u32 2147483647, %v1799
    %vm1915 = vcmp.eq.f32.partialorder %v1914, 8.507059e+37
    %v1916 = vand.u32 %v1799, 2147483648
    %v1917 = vor.u32 1.1754944e-38, %v1916
    %v1918 = vsel %vm1915, %v1917, %v1913
    %v1919 = vmul.f32 %v1775, %v1918
    %v1921 = vsel %vm587, %v1814, 0
    %v1924 = vsel %vm587, %v1829, 0
    %1926 = vmatpush.msra.mxu0 0.0
    %1927 = vmatpush.msra.mxu0 0.0
    %1928 = vmatpush.msra.mxu0 0.0
    %1929 = vmatpush.msra.mxu0 0.0
    %1930 = vmatpush.msra.mxu0 0.0
    %1931 = vmatpush.msra.mxu0 0.0
    %1932 = vmatpush.msra.mxu0 0.0
    %1933 = vmatpush.msra.mxu0 0.0
    %1934 = vmatpush.msra.mxu0 0.0
    %1935 = vmatpush.msra.mxu0 0.0
    %1936 = vmatpush.msra.mxu0 0.0
    %1937 = vmatpush.msra.mxu0 0.0
    %1938 = vmatpush.msra.mxu0 0.0
    %1939 = vmatpush.msra.mxu0 0.0
    %1940 = vmatpush.msra.mxu0 %v1508
    %1941 = vmatpush.msra.mxu0 %v1505
    %1942 = vmatmul.f32.gmra.mxu0 %v1921
    %v1943 = vpop.f32.mrf.mxu0
    %v1944 = vadd.f32 0.0, %v1943
    %1945 = vmatmul.f32.gmra.mxu0 %v1924
    %v1946 = vpop.f32.mrf.mxu0
    %v1947 = vadd.f32 0.0, %v1946
    %1948 = vdwg.mxu0
    %v1950 = vsel %vm587, %v1844, 0
    %v1953 = vsel %vm587, %v1859, 0
    %1955 = vmatpush.msra.mxu0 0.0
    %1956 = vmatpush.msra.mxu0 0.0
    %1957 = vmatpush.msra.mxu0 0.0
    %1958 = vmatpush.msra.mxu0 0.0
    %1959 = vmatpush.msra.mxu0 0.0
    %1960 = vmatpush.msra.mxu0 0.0
    %1961 = vmatpush.msra.mxu0 0.0
    %1962 = vmatpush.msra.mxu0 0.0
    %1963 = vmatpush.msra.mxu0 0.0
    %1964 = vmatpush.msra.mxu0 0.0
    %1965 = vmatpush.msra.mxu0 0.0
    %1966 = vmatpush.msra.mxu0 0.0
    %1967 = vmatpush.msra.mxu0 0.0
    %1968 = vmatpush.msra.mxu0 0.0
    %1969 = vmatpush.msra.mxu0 %v1534
    %1970 = vmatpush.msra.mxu0 %v1531
    %1971 = vmatmul.f32.gmra.mxu0 %v1950
    %v1972 = vpop.f32.mrf.mxu0
    %v1973 = vadd.f32 0.0, %v1972
    %1974 = vmatmul.f32.gmra.mxu0 %v1953
    %v1975 = vpop.f32.mrf.mxu0
    %v1976 = vadd.f32 0.0, %v1975
    %1977 = vdwg.mxu0
    %v1979 = vsel %vm587, %v1874, 0
    %v1982 = vsel %vm587, %v1889, 0
    %1984 = vmatpush.msra.mxu0 0.0
    %1985 = vmatpush.msra.mxu0 0.0
    %1986 = vmatpush.msra.mxu0 0.0
    %1987 = vmatpush.msra.mxu0 0.0
    %1988 = vmatpush.msra.mxu0 0.0
    %1989 = vmatpush.msra.mxu0 0.0
    %1990 = vmatpush.msra.mxu0 0.0
    %1991 = vmatpush.msra.mxu0 0.0
    %1992 = vmatpush.msra.mxu0 0.0
    %1993 = vmatpush.msra.mxu0 0.0
    %1994 = vmatpush.msra.mxu0 0.0
    %1995 = vmatpush.msra.mxu0 0.0
    %1996 = vmatpush.msra.mxu0 0.0
    %1997 = vmatpush.msra.mxu0 0.0
    %1998 = vmatpush.msra.mxu0 %v1560
    %1999 = vmatpush.msra.mxu0 %v1557
    %2000 = vmatmul.f32.gmra.mxu0 %v1979
    %v2001 = vpop.f32.mrf.mxu0
    %v2002 = vadd.f32 0.0, %v2001
    %2003 = vmatmul.f32.gmra.mxu0 %v1982
    %v2004 = vpop.f32.mrf.mxu0
    %v2005 = vadd.f32 0.0, %v2004
    %2006 = vdwg.mxu0
    %v2008 = vsel %vm587, %v1904, 0
    %v2011 = vsel %vm587, %v1919, 0
    %2013 = vmatpush.msra.mxu0 0.0
    %2014 = vmatpush.msra.mxu0 0.0
    %2015 = vmatpush.msra.mxu0 0.0
    %2016 = vmatpush.msra.mxu0 0.0
    %2017 = vmatpush.msra.mxu0 0.0
    %2018 = vmatpush.msra.mxu0 0.0
    %2019 = vmatpush.msra.mxu0 0.0
    %2020 = vmatpush.msra.mxu0 0.0
    %2021 = vmatpush.msra.mxu0 0.0
    %2022 = vmatpush.msra.mxu0 0.0
    %2023 = vmatpush.msra.mxu0 0.0
    %2024 = vmatpush.msra.mxu0 0.0
    %2025 = vmatpush.msra.mxu0 0.0
    %2026 = vmatpush.msra.mxu0 0.0
    %2027 = vmatpush.msra.mxu0 %v1586
    %2028 = vmatpush.msra.mxu0 %v1583
    %2029 = vmatmul.f32.gmra.mxu0 %v2008
    %v2030 = vpop.f32.mrf.mxu0
    %v2031 = vadd.f32 0.0, %v2030
    %2032 = vmatmul.f32.gmra.mxu0 %v2011
    %v2033 = vpop.f32.mrf.mxu0
    %v2034 = vadd.f32 0.0, %v2033
    %2035 = vdwg.mxu0
    %v2037 = vsel %vm446, %v1944, 0
    %v2040 = vsel %vm446, %v1947, 0
    %2042 = vmatpush.msra.mxu0 0.0
    %2043 = vmatpush.msra.mxu0 0.0
    %2044 = vmatpush.msra.mxu0 0.0
    %2045 = vmatpush.msra.mxu0 0.0
    %2046 = vmatpush.msra.mxu0 0.0
    %2047 = vmatpush.msra.mxu0 0.0
    %2048 = vmatpush.msra.mxu0 0.0
    %2049 = vmatpush.msra.mxu0 0.0
    %2050 = vmatpush.msra.mxu0 0.0
    %2051 = vmatpush.msra.mxu0 0.0
    %2052 = vmatpush.msra.mxu0 0.0
    %2053 = vmatpush.msra.mxu0 0.0
    %2054 = vmatpush.msra.mxu0 0.0
    %2055 = vmatpush.msra.mxu0 0.0
    %2056 = vmatpush.msra.mxu0 0.0
    %2057 = vmatpush.msra.mxu0 %v1247
    %2058 = vmatmul.f32.gmra.mxu0 %v2037
    %v2059 = vpop.f32.mrf.mxu0
    %v2060 = vadd.f32 0.0, %v2059
    %2061 = vmatmul.f32.gmra.mxu0 %v2040
    %v2062 = vpop.f32.mrf.mxu0
    %v2063 = vadd.f32 0.0, %v2062
    %2064 = vdwg.mxu0
    %v2066 = vsel %vm446, %v1973, 0
    %v2069 = vsel %vm446, %v1976, 0
    %2071 = vmatpush.msra.mxu0 0.0
    %2072 = vmatpush.msra.mxu0 0.0
    %2073 = vmatpush.msra.mxu0 0.0
    %2074 = vmatpush.msra.mxu0 0.0
    %2075 = vmatpush.msra.mxu0 0.0
    %2076 = vmatpush.msra.mxu0 0.0
    %2077 = vmatpush.msra.mxu0 0.0
    %2078 = vmatpush.msra.mxu0 0.0
    %2079 = vmatpush.msra.mxu0 0.0
    %2080 = vmatpush.msra.mxu0 0.0
    %2081 = vmatpush.msra.mxu0 0.0
    %2082 = vmatpush.msra.mxu0 0.0
    %2083 = vmatpush.msra.mxu0 0.0
    %2084 = vmatpush.msra.mxu0 0.0
    %2085 = vmatpush.msra.mxu0 0.0
    %2086 = vmatpush.msra.mxu0 %v1248
    %2087 = vmatmul.f32.gmra.mxu0 %v2066
    %v2088 = vpop.f32.mrf.mxu0
    %v2089 = vadd.f32 0.0, %v2088
    %2090 = vmatmul.f32.gmra.mxu0 %v2069
    %v2091 = vpop.f32.mrf.mxu0
    %v2092 = vadd.f32 0.0, %v2091
    %2093 = vdwg.mxu0
    %v2095 = vsel %vm446, %v2002, 0
    %v2098 = vsel %vm446, %v2005, 0
    %2100 = vmatpush.msra.mxu0 0.0
    %2101 = vmatpush.msra.mxu0 0.0
    %2102 = vmatpush.msra.mxu0 0.0
    %2103 = vmatpush.msra.mxu0 0.0
    %2104 = vmatpush.msra.mxu0 0.0
    %2105 = vmatpush.msra.mxu0 0.0
    %2106 = vmatpush.msra.mxu0 0.0
    %2107 = vmatpush.msra.mxu0 0.0
    %2108 = vmatpush.msra.mxu0 0.0
    %2109 = vmatpush.msra.mxu0 0.0
    %2110 = vmatpush.msra.mxu0 0.0
    %2111 = vmatpush.msra.mxu0 0.0
    %2112 = vmatpush.msra.mxu0 0.0
    %2113 = vmatpush.msra.mxu0 0.0
    %2114 = vmatpush.msra.mxu0 0.0
    %2115 = vmatpush.msra.mxu0 %v1249
    %2116 = vmatmul.f32.gmra.mxu0 %v2095
    %v2117 = vpop.f32.mrf.mxu0
    %v2118 = vadd.f32 0.0, %v2117
    %2119 = vmatmul.f32.gmra.mxu0 %v2098
    %v2120 = vpop.f32.mrf.mxu0
    %v2121 = vadd.f32 0.0, %v2120
    %2122 = vdwg.mxu0
    %v2124 = vsel %vm446, %v2031, 0
    %v2127 = vsel %vm446, %v2034, 0
    %2129 = vmatpush.msra.mxu0 0.0
    %2130 = vmatpush.msra.mxu0 0.0
    %2131 = vmatpush.msra.mxu0 0.0
    %2132 = vmatpush.msra.mxu0 0.0
    %2133 = vmatpush.msra.mxu0 0.0
    %2134 = vmatpush.msra.mxu0 0.0
    %2135 = vmatpush.msra.mxu0 0.0
    %2136 = vmatpush.msra.mxu0 0.0
    %2137 = vmatpush.msra.mxu0 0.0
    %2138 = vmatpush.msra.mxu0 0.0
    %2139 = vmatpush.msra.mxu0 0.0
    %2140 = vmatpush.msra.mxu0 0.0
    %2141 = vmatpush.msra.mxu0 0.0
    %2142 = vmatpush.msra.mxu0 0.0
    %2143 = vmatpush.msra.mxu0 0.0
    %2144 = vmatpush.msra.mxu0 %v1250
    %2145 = vmatmul.f32.gmra.mxu0 %v2124
    %v2146 = vpop.f32.mrf.mxu0
    %v2147 = vadd.f32 0.0, %v2146
    %2148 = vmatmul.f32.gmra.mxu0 %v2127
    %v2149 = vpop.f32.mrf.mxu0
    %v2150 = vadd.f32 0.0, %v2149
    %2151 = vdwg.mxu0
    %v2152 = vsel %vm127, %v2060, 0.0
    %v2153 = vsel %vm127, %v2089, 0.0
    %v2154 = vadd.f32 %v2152, %v2153
    %v2155 = vsel %vm127, %v2118, 0.0
    %v2156 = vadd.f32 %v2154, %v2155
    %v2157 = vsel %vm127, %v2147, 0.0
    %v2158 = vadd.f32 %v2156, %v2157
    %v2159 = vsel %vm127, %v2063, 0.0
    %v2160 = vsel %vm127, %v2092, 0.0
    %v2161 = vadd.f32 %v2159, %v2160
    %v2162 = vsel %vm127, %v2121, 0.0
    %v2163 = vadd.f32 %v2161, %v2162
    %v2164 = vsel %vm127, %v2150, 0.0
    %v2165 = vadd.f32 %v2163, %v2164
    %v2166 = vperm.slane %v1251, 0
    %v2167 = vadd.f32 %v2158, %v2166
    %v2168 = vadd.f32 %v2165, %v2166
    %v2169 = vadd.f32 %v1209, %v2167
    %v2170 = vadd.f32 %v1210, %v2168
    %v2171 = vsel %vm127, %v2169, 0.0
    %2172 = vadd.xlane.f32.xlu0 %v2171
    %v2173 = vpop.xlane.xlu0 %2172
    %v2174 = vsel %vm127, %v2170, 0.0
    %2175 = vadd.xlane.f32.xlu0 %v2174
    %v2176 = vpop.xlane.xlu0 %2175
    %v2177 = vmul.f32 %v2173, %v1043
    %v2178 = vmul.f32 %v2176, %v1043
    %v2179 = vmul.f32 %v2169, %v2169
    %v2180 = vmul.f32 %v2170, %v2170
    %v2181 = vsel %vm127, %v2179, 0.0
    %2182 = vadd.xlane.f32.xlu0 %v2181
    %v2183 = vpop.xlane.xlu0 %2182
    %v2184 = vsel %vm127, %v2180, 0.0
    %2185 = vadd.xlane.f32.xlu0 %v2184
    %v2186 = vpop.xlane.xlu0 %2185
    %v2187 = vmul.f32 %v2183, %v1043
    %v2188 = vmul.f32 %v2186, %v1043
    %v2189 = vmul.f32 %v2177, %v2177
    %v2190 = vmul.f32 %v2178, %v2178
    %v2191 = vsub.f32 %v2187, %v2189
    %v2192 = vsub.f32 %v2188, %v2190
    %v2193 = vsub.f32 %v2169, %v2177
    %v2194 = vsub.f32 %v2170, %v2178
    %v2195 = vadd.f32 %v2191, 1e-05
    %v2196 = vadd.f32 %v2192, 1e-05
    %v2197 = vrsqrt.pop %v2195
    %v2198 = vmul.f32 %v2197, %v2195
    %v2199 = vmul.f32 %v2198, %v2197
    %v2200 = vmul.f32 0.5, %v2199
    %v2201 = vsub.f32 1.5, %v2200
    %v2202 = vmul.f32 %v2197, %v2201
    %vm2203 = vweird.f32 %v2195
    %vm2204 = vweird.f32 %v2197
    %vm2205 = vmor %vm2203, %vm2204
    %v2206 = vsel %vm2205, %v2197, %v2202
    %v2207 = vrsqrt.pop %v2196
    %v2208 = vmul.f32 %v2207, %v2196
    %v2209 = vmul.f32 %v2208, %v2207
    %v2210 = vmul.f32 0.5, %v2209
    %v2211 = vsub.f32 1.5, %v2210
    %v2212 = vmul.f32 %v2207, %v2211
    %vm2213 = vweird.f32 %v2196
    %vm2214 = vweird.f32 %v2207
    %vm2215 = vmor %vm2213, %vm2214
    %v2216 = vsel %vm2215, %v2207, %v2212
    %v2217 = vmul.f32 %v2193, %v2206
    %v2218 = vmul.f32 %v2194, %v2216
    %v2219 = vperm.slane %v1252, 0
    %v2220 = vmul.f32 %v2217, %v2219
    %v2221 = vmul.f32 %v2218, %v2219
    %v2222 = vperm.slane %v1253, 0
    %v2223 = vadd.f32 %v2220, %v2222
    %v2224 = vadd.f32 %v2221, %v2222
    %v2225 = vperm.slane %v1260, 0
    %v2227 = vsel %vm127, %v2223, 0
    %v2230 = vsel %vm127, %v2224, 0
    %2232 = vmatpush.msra.mxu0 0.0
    %2233 = vmatpush.msra.mxu0 0.0
    %2234 = vmatpush.msra.mxu0 0.0
    %2235 = vmatpush.msra.mxu0 0.0
    %2236 = vmatpush.msra.mxu0 0.0
    %2237 = vmatpush.msra.mxu0 0.0
    %2238 = vmatpush.msra.mxu0 0.0
    %2239 = vmatpush.msra.mxu0 0.0
    %2240 = vmatpush.msra.mxu0 0.0
    %2241 = vmatpush.msra.mxu0 0.0
    %2242 = vmatpush.msra.mxu0 0.0
    %2243 = vmatpush.msra.mxu0 0.0
    %2244 = vmatpush.msra.mxu0 %v1259
    %2245 = vmatpush.msra.mxu0 %v1258
    %2246 = vmatpush.msra.mxu0 %v1257
    %2247 = vmatpush.msra.mxu0 %v1256
    %2248 = vmatmul.f32.gmra.mxu0 %v2227
    %v2249 = vpop.f32.mrf.mxu0
    %v2250 = vadd.f32 %v2225, %v2249
    %2251 = vmatmul.f32.gmra.mxu0 %v2230
    %v2252 = vpop.f32.mrf.mxu0
    %v2253 = vadd.f32 %v2225, %v2252
    %2254 = vdwg.mxu0
    %v2255 = vmax.f32 %v2250, 0.0
    %v2256 = vmax.f32 %v2253, 0.0
    %v2257 = vperm.slane %v1269, 0
    %v2259 = vsel %vm1125, %v2255, 0
    %v2262 = vsel %vm1125, %v2256, 0
    %2264 = vmatpush.msra.mxu0 0.0
    %2265 = vmatpush.msra.mxu0 0.0
    %2266 = vmatpush.msra.mxu0 0.0
    %2267 = vmatpush.msra.mxu0 0.0
    %2268 = vmatpush.msra.mxu0 0.0
    %2269 = vmatpush.msra.mxu0 0.0
    %2270 = vmatpush.msra.mxu0 0.0
    %2271 = vmatpush.msra.mxu0 0.0
    %2272 = vmatpush.msra.mxu0 %v1268
    %2273 = vmatpush.msra.mxu0 %v1267
    %2274 = vmatpush.msra.mxu0 %v1266
    %2275 = vmatpush.msra.mxu0 %v1265
    %2276 = vmatpush.msra.mxu0 %v1264
    %2277 = vmatpush.msra.mxu0 %v1263
    %2278 = vmatpush.msra.mxu0 %v1262
    %2279 = vmatpush.msra.mxu0 %v1261
    %2280 = vmatmul.f32.gmra.mxu0 %v2259
    %v2281 = vpop.f32.mrf.mxu0
    %v2282 = vadd.f32 %v2257, %v2281
    %2283 = vmatmul.f32.gmra.mxu0 %v2262
    %v2284 = vpop.f32.mrf.mxu0
    %v2285 = vadd.f32 %v2257, %v2284
    %2286 = vdwg.mxu0
    %v2287 = vadd.f32 %v2223, %v2282
    %v2288 = vadd.f32 %v2224, %v2285
    %v2289 = vsel %vm127, %v2287, 0.0
    %2290 = vadd.xlane.f32.xlu0 %v2289
    %v2291 = vpop.xlane.xlu0 %2290
    %v2292 = vsel %vm127, %v2288, 0.0
    %2293 = vadd.xlane.f32.xlu0 %v2292
    %v2294 = vpop.xlane.xlu0 %2293
    %v2295 = vmul.f32 %v2291, %v1043
    %v2296 = vmul.f32 %v2294, %v1043
    %v2297 = vmul.f32 %v2287, %v2287
    %v2298 = vmul.f32 %v2288, %v2288
    %v2299 = vsel %vm127, %v2297, 0.0
    %2300 = vadd.xlane.f32.xlu0 %v2299
    %v2301 = vpop.xlane.xlu0 %2300
    %v2302 = vsel %vm127, %v2298, 0.0
    %2303 = vadd.xlane.f32.xlu0 %v2302
    %v2304 = vpop.xlane.xlu0 %2303
    %v2305 = vmul.f32 %v2301, %v1043
    %v2306 = vmul.f32 %v2304, %v1043
    %v2307 = vmul.f32 %v2295, %v2295
    %v2308 = vmul.f32 %v2296, %v2296
    %v2309 = vsub.f32 %v2305, %v2307
    %v2310 = vsub.f32 %v2306, %v2308
    %v2311 = vsub.f32 %v2287, %v2295
    %v2312 = vsub.f32 %v2288, %v2296
    %v2313 = vadd.f32 %v2309, 1e-05
    %v2314 = vadd.f32 %v2310, 1e-05
    %v2315 = vrsqrt.pop %v2313
    %v2316 = vmul.f32 %v2315, %v2313
    %v2317 = vmul.f32 %v2316, %v2315
    %v2318 = vmul.f32 0.5, %v2317
    %v2319 = vsub.f32 1.5, %v2318
    %v2320 = vmul.f32 %v2315, %v2319
    %vm2321 = vweird.f32 %v2313
    %vm2322 = vweird.f32 %v2315
    %vm2323 = vmor %vm2321, %vm2322
    %v2324 = vsel %vm2323, %v2315, %v2320
    %v2325 = vrsqrt.pop %v2314
    %v2326 = vmul.f32 %v2325, %v2314
    %v2327 = vmul.f32 %v2326, %v2325
    %v2328 = vmul.f32 0.5, %v2327
    %v2329 = vsub.f32 1.5, %v2328
    %v2330 = vmul.f32 %v2325, %v2329
    %vm2331 = vweird.f32 %v2314
    %vm2332 = vweird.f32 %v2325
    %vm2333 = vmor %vm2331, %vm2332
    %v2334 = vsel %vm2333, %v2325, %v2330
    %v2335 = vmul.f32 %v2311, %v2324
    %v2336 = vmul.f32 %v2312, %v2334
    %v2337 = vperm.slane %v1254, 0
    %v2338 = vmul.f32 %v2335, %v2337
    %v2339 = vmul.f32 %v2336, %v2337
    %v2340 = vperm.slane %v1255, 0
    %v2341 = vadd.f32 %v2338, %v2340
    %v2342 = vadd.f32 %v2339, %v2340
    %v2343 = vld [vmem:[#allocation2 + $0x28] sm:$0xff]
    %v2344 = vld [vmem:[#allocation2 + $0x30] sm:$0xff]
    %v2345 = vld [vmem:[#allocation2 + $0x38] sm:$0xff]
    %v2346 = vld [vmem:[#allocation2 + $0x40] sm:$0xff]
    %v2347 = vld [vmem:[#allocation2 + $0x48] sm:$0x1]
    %s2349 = vtos %v2347
    %v2350 = vstv %s2349
    %v2353 = vsel %vm127, %v2341, 0
    %v2356 = vsel %vm127, %v2342, 0
    %2358 = vmatpush.msra.mxu0 0.0
    %2359 = vmatpush.msra.mxu0 0.0
    %2360 = vmatpush.msra.mxu0 0.0
    %2361 = vmatpush.msra.mxu0 0.0
    %2362 = vmatpush.msra.mxu0 0.0
    %2363 = vmatpush.msra.mxu0 0.0
    %2364 = vmatpush.msra.mxu0 0.0
    %2365 = vmatpush.msra.mxu0 0.0
    %2366 = vmatpush.msra.mxu0 0.0
    %2367 = vmatpush.msra.mxu0 0.0
    %2368 = vmatpush.msra.mxu0 0.0
    %2369 = vmatpush.msra.mxu0 0.0
    %2370 = vmatpush.msra.mxu0 %v2346
    %2371 = vmatpush.msra.mxu0 %v2345
    %2372 = vmatpush.msra.mxu0 %v2344
    %2373 = vmatpush.msra.mxu0 %v2343
    %2374 = vmatmul.f32.gmra.mxu0 %v2353
    %v2375 = vpop.f32.mrf.mxu0
    %v2376 = vadd.f32 %v2350, %v2375
    %2377 = vmatmul.f32.gmra.mxu0 %v2356
    %v2378 = vpop.f32.mrf.mxu0
    %v2379 = vadd.f32 %v2350, %v2378
    %2380 = vdwg.mxu0
    %2381 = vst [vmem:[%s2] sm:$0xff] %v2376
    %2382 = vst [vmem:[%s2 + $0x8] sm:$0xff] %v2379
    // Predicated region
    $region14: #{moirai_forward.1} parent=1 // pred_check
      _
    $region15: #{moirai_forward.1} parent=1 // pred_check_branch
      %2384 = sbr.rel (0) target = $region17
    $region16: #{moirai_forward.1} parent=1 // pred_region
      _
    $region17: #{moirai_forward.1} parent=1 // pred_fallthru
      _
    // Predicated region
    $region18: #{moirai_forward.1} parent=1 // pred_check
      _
    $region19: #{moirai_forward.1} parent=1 // pred_check_branch
      %2386 = sbr.rel (0) target = $region21
    $region20: #{moirai_forward.1} parent=1 // pred_region
      _
    $region21: #{moirai_forward.1} parent=1 // pred_fallthru
      _
    %2387 = vsyncpa [#allocation3], 1

</llo_original>
